<compile_context>
chip_gen: v5e
topology: v5e:2x2
jax: 0.10.0
libtpu: 0.0.40
codegen_flags: <defaults>
</compile_context>

<pallas_src>
import functools

import jax
import jax.numpy as jnp
from jax import lax
from jax.experimental import pallas as pl
from jax.experimental.pallas import tpu as pltpu

EPS = 1e-5  # PyTorch BatchNorm2d default eps


def _mbconv6_kernel(K, W, shortcut,
                    x_ref, mask_ref, w1_ref, b1_ref, wd_ref, bd_ref,
                    w2_ref, b2_ref, s3_ref, o3_ref,
                    ws1_ref, bs1_ref, ws2_ref, bs2_ref,
                    w3_ref, b3_ref, o_ref):
    P = K // 2
    x = x_ref[0]                                   # (Cin, HW) f32, lane-dense
    HW = x.shape[1]

    # --- 1x1 expand conv (+bias) + BN (folded) + Swish(v) = v + sigmoid(v) ---
    t = jnp.dot(w1_ref[...], x.astype(jnp.bfloat16),
                preferred_element_type=jnp.float32) + b1_ref[...]   # (C6, HW)
    t = t + jax.nn.sigmoid(t)

    # --- depthwise KxK conv (stride 1, pad K//2) + BN (folded) + ReLU --------
    # Each tap = lane-roll of the flattened spatial axis (XLU slot, idle here)
    # scaled by (precomputed halo mask) x (per-channel BN-folded tap weight).
    # No scratch buffer, no halo zeroing, no in-kernel integer index math.
    wd = wd_ref[...]                               # (C6, K*K) f32
    masks = mask_ref[...]                          # (K*K, 1, HW) f32 in {0,1}
    acc = None
    for dh in range(K):
        for dw in range(K):
            idx = dh * K + dw
            d = (dh - P) * W + (dw - P)
            shifted = t if d == 0 else pltpu.roll(t, shift=(-d) % HW, axis=1)
            term = shifted * (masks[idx] * wd[:, idx:idx + 1])      # (C6, HW)
            acc = term if acc is None else acc + term
    y = jnp.maximum(acc + bd_ref[...], 0.0)

    # --- pointwise 1x1 conv + BN (folded) + ReLU -----------------------------
    z = jnp.dot(w2_ref[...], y.astype(jnp.bfloat16),
                preferred_element_type=jnp.float32) + b2_ref[...]
    z = jnp.maximum(z, 0.0)

    # --- extra BN + Swish -----------------------------------------------------
    z = z * s3_ref[...] + o3_ref[...]
    z = z + jax.nn.sigmoid(z)

    # --- SE: global avg pool -> 1x1 -> Swish -> 1x1 -> sigmoid -> scale -------
    m = jnp.mean(z, axis=1, keepdims=True)                          # (C6, 1)
    e = jnp.dot(ws1_ref[...], m, preferred_element_type=jnp.float32) + bs1_ref[...]
    e = e + jax.nn.sigmoid(e)
    g = jax.nn.sigmoid(
        jnp.dot(ws2_ref[...], e, preferred_element_type=jnp.float32) + bs2_ref[...])
    z = z * g

    # --- project 1x1 conv (+bias) + BN (folded) -------------------------------
    out = jnp.dot(w3_ref[...], z.astype(jnp.bfloat16),
                  preferred_element_type=jnp.float32) + b3_ref[...]
    if shortcut:
        out = out + x
    o_ref[...] = out[None]                         # lane-dense (Cout, HW) store


def init_params(key, cin, cout, ks):
    """Deterministic parameter init in PyTorch layout/shapes."""
    c6 = 6 * cin
    chid = 4 * c6
    keys = iter(jax.random.split(key, 32))

    def nrm(shape, scale=0.1):
        return scale * jax.random.normal(next(keys), shape, jnp.float32)

    def bn(c):
        return dict(gamma=1.0 + nrm((c,)), beta=nrm((c,)), mean=nrm((c,)),
                    var=0.5 + jax.random.uniform(next(keys), (c,), jnp.float32))

    return dict(
        w1=nrm((c6, cin, 1, 1)), b1=nrm((c6,)), bn1=bn(c6),
        wd=nrm((c6, 1, ks, ks)), bnd=bn(c6),
        w2=nrm((c6, c6, 1, 1)), bn2=bn(c6),
        bn3=bn(c6),
        ws1=nrm((chid, c6, 1, 1)), bs1=nrm((chid,)),
        ws2=nrm((c6, chid, 1, 1)), bs2=nrm((c6,)),
        w3=nrm((cout, c6, 1, 1)), b3=nrm((cout,)), bn4=bn(cout),
    )


def fold_params(p, matmul_dtype=jnp.bfloat16):
    """Fold eval-mode BatchNorms; emit (Cout, Cin) weights and (C, 1) biases.

    1x1-conv matmul weights are cast to bf16 (MXU-native, half DMA bytes);
    biases/BN folds, depthwise weights and SE weights stay in f32.
    """
    def bn_scale(d):
        s = d['gamma'] / jnp.sqrt(d['var'] + EPS)
        return s, d['beta'] - d['mean'] * s

    def fold_1x1(w, b, d):
        s, off = bn_scale(d)
        W = w[:, :, 0, 0] * s[:, None]                               # (Cout, Cin)
        bias = (jnp.zeros(w.shape[0], jnp.float32) if b is None else b) * s + off
        return W.astype(matmul_dtype), bias[:, None].astype(jnp.float32)

    W1, B1 = fold_1x1(p['w1'], p['b1'], p['bn1'])
    sd, offd = bn_scale(p['bnd'])
    c6, _, ks, _ = p['wd'].shape
    WD = (p['wd'][:, 0].reshape(c6, ks * ks) * sd[:, None]).astype(jnp.float32)
    BD = offd[:, None]
    W2, B2 = fold_1x1(p['w2'], None, p['bn2'])
    s3, off3 = bn_scale(p['bn3'])
    WS1, BS1 = p['ws1'][:, :, 0, 0], p['bs1'][:, None]
    WS2, BS2 = p['ws2'][:, :, 0, 0], p['bs2'][:, None]
    W3, B3 = fold_1x1(p['w3'], p['b3'], p['bn4'])
    return (W1, B1, WD, BD, W2, B2, s3[:, None], off3[:, None],
            WS1, BS1, WS2, BS2, W3, B3)


def _halo_masks(K, H, W):
    """Per-tap {0,1} halo masks on the flattened spatial axis, shape (K*K,1,HW)."""
    P = K // 2
    pos = jnp.arange(H * W, dtype=jnp.int32)
    h = pos // W
    w = pos % W
    rows = []
    for dh in range(K):
        for dw in range(K):
            ok = ((h + (dh - P) >= 0) & (h + (dh - P) < H) &
                  (w + (dw - P) >= 0) & (w + (dw - P) < W))
            rows.append(ok)
    return jnp.stack(rows).astype(jnp.float32).reshape(K * K, 1, H * W)


def mbconv6_forward(x_nchw, raw_params, kernel_size, stride):
    N, Cin, H, W = x_nchw.shape
    Cout = raw_params['w3'].shape[0]
    C6 = 6 * Cin
    Chid = 4 * C6
    HW = H * W
    shortcut = (stride == 1) and (Cin == Cout)
    assert stride == 1  # TODO(synk): stride>1 depthwise conv not implemented in-kernel
    assert kernel_size in (3, 5)   # module uses padding=K//2 only for K in {3,5}
    assert HW % 128 == 0           # lane-dense spatial axis (CIFAR 16x16 et al.)

    folded = fold_params(raw_params)
    consts = (_halo_masks(kernel_size, H, W),) + folded
    # NCHW -> (N, C, H*W): free reshape, no wrapper transpose needed.
    x = x_nchw.reshape(N, Cin, HW).astype(jnp.float32)

    def _const(a):
        nd = a.ndim
        return pl.BlockSpec(a.shape, lambda b, nd=nd: (0,) * nd)
    # TODO(synk): for realistic EfficientNet shapes (H=W=56..112, C6>=96) tile H
    # into row blocks with a (K-1) halo and single-buffer the constant weight
    # operands (pipeline_mode=pl.Buffered(1)) to stay inside v7x's 64 MiB VMEM.

    kernel = functools.partial(_mbconv6_kernel, kernel_size, W, shortcut)

    K = kernel_size
    flops = (2 * N * HW * (Cin * C6 + K * K * C6 + C6 * C6 + C6 * Cout)
             + 4 * N * C6 * Chid)
    transcendentals = N * (2 * C6 * HW + Chid + 2 * C6)
    bytes_accessed = 4 * (x.size + N * Cout * HW) + sum(
        int(a.size) * a.dtype.itemsize for a in consts)

    out = pl.pallas_call(
        kernel,
        out_shape=jax.ShapeDtypeStruct((N, Cout, HW), jnp.float32),
        grid_spec=pltpu.PrefetchScalarGridSpec(
            num_scalar_prefetch=0,
            grid=(N,),
            in_specs=[pl.BlockSpec((1, Cin, HW), lambda b: (b, 0, 0))]
                     + [_const(a) for a in consts],
            out_specs=pl.BlockSpec((1, Cout, HW), lambda b: (b, 0, 0)),
        ),
        # Batch iterations are independent -> shard across v7x's two TensorCores.
        compiler_params=pltpu.CompilerParams(dimension_semantics=("parallel",)),
        cost_estimate=pl.CostEstimate(flops=flops,
                                      transcendentals=transcendentals,
                                      bytes_accessed=bytes_accessed),
    )(x, *consts)

    return out.reshape(N, Cout, H, W)              # free reshape back to NCHW


def mbconv6_reference(x, p, kernel_size, stride):
    """Pure-JAX reference mirroring the PyTorch module (eval mode), NCHW."""
    def bn(v, d):
        s = d['gamma'] / jnp.sqrt(d['var'] + EPS)
        return v * s[None, :, None, None] + (d['beta'] - d['mean'] * s)[None, :, None, None]

    def conv1x1(v, w, b=None):
        y = jnp.einsum('nchw,oc->nohw', v, w[:, :, 0, 0])
        return y if b is None else y + b[None, :, None, None]

    def swish(v):
        return v + jax.nn.sigmoid(v)

    N, Cin, H, W = x.shape
    Cout = p['w3'].shape[0]
    c6 = 6 * Cin
    pad = kernel_size // 2
    t = swish(bn(conv1x1(x, p['w1'], p['b1']), p['bn1']))
    dw = lax.conv_general_dilated(
        t, p['wd'], window_strides=(stride, stride),
        padding=((pad, pad), (pad, pad)),
        dimension_numbers=('NCHW', 'OIHW', 'NCHW'), feature_group_count=c6)
    dw = jnp.maximum(bn(dw, p['bnd']), 0.0)
    pw = jnp.maximum(bn(conv1x1(dw, p['w2']), p['bn2']), 0.0)
    z = swish(bn(pw, p['bn3']))
    s = jnp.mean(z, axis=(2, 3), keepdims=True)
    e = swish(conv1x1(s, p['ws1'], p['bs1']))
    g = jax.nn.sigmoid(conv1x1(e, p['ws2'], p['bs2']))
    z = z * g
    out = bn(conv1x1(z, p['w3'], p['b3']), p['bn4'])
    if stride == 1 and Cin == Cout:
        out = out + x
    return out


if __name__ == "__main__":
    N, Cin, H, W = 2, 4, 16, 16
    Cout, ks, stride = 4, 3, 1

    key = jax.random.PRNGKey(0)
    kx, kp = jax.random.split(key)
    x = jax.random.normal(kx, (N, Cin, H, W), jnp.float32)
    params = init_params(kp, Cin, Cout, ks)

    out = mbconv6_forward(x, params, ks, stride)
    out = jax.block_until_ready(out)

    ref = mbconv6_reference(x, params, ks, stride)
    err = float(jnp.max(jnp.abs(out - ref)))
    # bf16 matmul operands with f32 accumulation -> small numeric delta vs f32 ref.
    assert err < 5e-2, f"max abs err {err}"
    print("KERNEL_OK")
</pallas_src>

<mosaic_0001>
module attributes {stable_mosaic.version = 11 : i64} {
  func.func @_mbconv6_kernel(%arg0: i32, %arg1: memref<1x4x256xf32, #tpu.memory_space<vmem>>, %arg2: memref<9x1x256xf32, #tpu.memory_space<vmem>>, %arg3: memref<24x4xbf16, #tpu.memory_space<vmem>>, %arg4: memref<24x1xf32, #tpu.memory_space<vmem>>, %arg5: memref<24x9xf32, #tpu.memory_space<vmem>>, %arg6: memref<24x1xf32, #tpu.memory_space<vmem>>, %arg7: memref<24x24xbf16, #tpu.memory_space<vmem>>, %arg8: memref<24x1xf32, #tpu.memory_space<vmem>>, %arg9: memref<24x1xf32, #tpu.memory_space<vmem>>, %arg10: memref<24x1xf32, #tpu.memory_space<vmem>>, %arg11: memref<96x24xf32, #tpu.memory_space<vmem>>, %arg12: memref<96x1xf32, #tpu.memory_space<vmem>>, %arg13: memref<24x96xf32, #tpu.memory_space<vmem>>, %arg14: memref<24x1xf32, #tpu.memory_space<vmem>>, %arg15: memref<4x24xbf16, #tpu.memory_space<vmem>>, %arg16: memref<4x1xf32, #tpu.memory_space<vmem>>, %arg17: memref<1x4x256xf32, #tpu.memory_space<vmem>>) attributes {dimension_semantics = [#tpu.dimension_semantics<parallel>], iteration_bounds = array<i64: 2>, scalar_prefetch = 0 : i64, scratch_operands = 0 : i64, tpu.core_type = #tpu.core_type<tc>, window_params = [{transform_indices = @transform_0, window_bounds = array<i64: 1, 4, 256>}, {pipeline_mode = #tpu.pipeline_mode<synchronous>, transform_indices = @transform_1, window_bounds = array<i64: 9, 1, 256>}, {pipeline_mode = #tpu.pipeline_mode<synchronous>, transform_indices = @transform_2, window_bounds = array<i64: 24, 4>}, {pipeline_mode = #tpu.pipeline_mode<synchronous>, transform_indices = @transform_3, window_bounds = array<i64: 24, 1>}, {pipeline_mode = #tpu.pipeline_mode<synchronous>, transform_indices = @transform_4, window_bounds = array<i64: 24, 9>}, {pipeline_mode = #tpu.pipeline_mode<synchronous>, transform_indices = @transform_5, window_bounds = array<i64: 24, 1>}, {pipeline_mode = #tpu.pipeline_mode<synchronous>, transform_indices = @transform_6, window_bounds = array<i64: 24, 24>}, {pipeline_mode = #tpu.pipeline_mode<synchronous>, transform_indices = @transform_7, window_bounds = array<i64: 24, 1>}, {pipeline_mode = #tpu.pipeline_mode<synchronous>, transform_indices = @transform_8, window_bounds = array<i64: 24, 1>}, {pipeline_mode = #tpu.pipeline_mode<synchronous>, transform_indices = @transform_9, window_bounds = array<i64: 24, 1>}, {pipeline_mode = #tpu.pipeline_mode<synchronous>, transform_indices = @transform_10, window_bounds = array<i64: 96, 24>}, {pipeline_mode = #tpu.pipeline_mode<synchronous>, transform_indices = @transform_11, window_bounds = array<i64: 96, 1>}, {pipeline_mode = #tpu.pipeline_mode<synchronous>, transform_indices = @transform_12, window_bounds = array<i64: 24, 96>}, {pipeline_mode = #tpu.pipeline_mode<synchronous>, transform_indices = @transform_13, window_bounds = array<i64: 24, 1>}, {pipeline_mode = #tpu.pipeline_mode<synchronous>, transform_indices = @transform_14, window_bounds = array<i64: 4, 24>}, {pipeline_mode = #tpu.pipeline_mode<synchronous>, transform_indices = @transform_15, window_bounds = array<i64: 4, 1>}, {transform_indices = @transform_16, window_bounds = array<i64: 1, 4, 256>}]} {
    %c0 = arith.constant 0 : index
    %c0_0 = arith.constant 0 : index
    %c0_1 = arith.constant 0 : index
    %0 = vector.load %arg1[%c0, %c0_0, %c0_1] : memref<1x4x256xf32, #tpu.memory_space<vmem>>, vector<1x4x256xf32>
    %1 = vector.shape_cast %0 : vector<1x4x256xf32> to vector<4x256xf32>
    %c0_2 = arith.constant 0 : index
    %c0_3 = arith.constant 0 : index
    %2 = vector.load %arg3[%c0_2, %c0_3] : memref<24x4xbf16, #tpu.memory_space<vmem>>, vector<24x4xbf16>
    %3 = arith.truncf %1 : vector<4x256xf32> to vector<4x256xbf16>
    %cst = arith.constant dense<0.000000e+00> : vector<24x256xf32>
    %4 = tpu.matmul %2, %3, %cst {dimension_numbers = #tpu.dot_dimension_numbers<[1], [0], [0], [1], [0, 0, 1, 1], [], []>} : vector<24x4xbf16>, vector<4x256xbf16>, vector<24x256xf32> -> vector<24x256xf32>
    %c0_4 = arith.constant 0 : index
    %c0_5 = arith.constant 0 : index
    %5 = vector.load %arg4[%c0_4, %c0_5] : memref<24x1xf32, #tpu.memory_space<vmem>>, vector<24x1xf32>
    %6 = vector.broadcast %5 : vector<24x1xf32> to vector<24x256xf32>
    %7 = arith.addf %4, %6 : vector<24x256xf32>
    %8 = arith.negf %7 : vector<24x256xf32>
    %9 = math.exp %8 : vector<24x256xf32>
    %cst_6 = arith.constant 1.000000e+00 : f32
    %10 = vector.broadcast %cst_6 : f32 to vector<24x256xf32>
    %11 = arith.addf %10, %9 : vector<24x256xf32>
    %12 = arith.divf %10, %11 : vector<24x256xf32>
    %13 = arith.addf %7, %12 : vector<24x256xf32>
    %c0_7 = arith.constant 0 : index
    %c0_8 = arith.constant 0 : index
    %14 = vector.load %arg5[%c0_7, %c0_8] : memref<24x9xf32, #tpu.memory_space<vmem>>, vector<24x9xf32>
    %c0_9 = arith.constant 0 : index
    %c0_10 = arith.constant 0 : index
    %c0_11 = arith.constant 0 : index
    %15 = vector.load %arg2[%c0_9, %c0_10, %c0_11] : memref<9x1x256xf32, #tpu.memory_space<vmem>>, vector<9x1x256xf32>
    %c17_i32 = arith.constant 17 : i32
    %16 = tpu.dynamic_rotate %13 by %c17_i32 dim 1 : vector<24x256xf32>, i32 -> vector<24x256xf32>
    %17 = vector.extract_strided_slice %15 {offsets = [0, 0, 0], sizes = [1, 1, 256], strides = [1, 1, 1]} : vector<9x1x256xf32> to vector<1x1x256xf32>
    %18 = vector.shape_cast %17 : vector<1x1x256xf32> to vector<1x256xf32>
    %19 = vector.extract_strided_slice %14 {offsets = [0, 0], sizes = [24, 1], strides = [1, 1]} : vector<24x9xf32> to vector<24x1xf32>
    %20 = vector.broadcast %18 : vector<1x256xf32> to vector<24x256xf32>
    %21 = vector.broadcast %19 : vector<24x1xf32> to vector<24x256xf32>
    %22 = arith.mulf %20, %21 : vector<24x256xf32>
    %23 = arith.mulf %16, %22 : vector<24x256xf32>
    %c16_i32 = arith.constant 16 : i32
    %24 = tpu.dynamic_rotate %13 by %c16_i32 dim 1 : vector<24x256xf32>, i32 -> vector<24x256xf32>
    %25 = vector.extract_strided_slice %15 {offsets = [1, 0, 0], sizes = [1, 1, 256], strides = [1, 1, 1]} : vector<9x1x256xf32> to vector<1x1x256xf32>
    %26 = vector.shape_cast %25 : vector<1x1x256xf32> to vector<1x256xf32>
    %27 = vector.extract_strided_slice %14 {offsets = [0, 1], sizes = [24, 1], strides = [1, 1]} : vector<24x9xf32> to vector<24x1xf32>
    %28 = vector.broadcast %26 : vector<1x256xf32> to vector<24x256xf32>
    %29 = vector.broadcast %27 : vector<24x1xf32> to vector<24x256xf32>
    %30 = arith.mulf %28, %29 : vector<24x256xf32>
    %31 = arith.mulf %24, %30 : vector<24x256xf32>
    %32 = arith.addf %23, %31 : vector<24x256xf32>
    %c15_i32 = arith.constant 15 : i32
    %33 = tpu.dynamic_rotate %13 by %c15_i32 dim 1 : vector<24x256xf32>, i32 -> vector<24x256xf32>
    %34 = vector.extract_strided_slice %15 {offsets = [2, 0, 0], sizes = [1, 1, 256], strides = [1, 1, 1]} : vector<9x1x256xf32> to vector<1x1x256xf32>
    %35 = vector.shape_cast %34 : vector<1x1x256xf32> to vector<1x256xf32>
    %36 = vector.extract_strided_slice %14 {offsets = [0, 2], sizes = [24, 1], strides = [1, 1]} : vector<24x9xf32> to vector<24x1xf32>
    %37 = vector.broadcast %35 : vector<1x256xf32> to vector<24x256xf32>
    %38 = vector.broadcast %36 : vector<24x1xf32> to vector<24x256xf32>
    %39 = arith.mulf %37, %38 : vector<24x256xf32>
    %40 = arith.mulf %33, %39 : vector<24x256xf32>
    %41 = arith.addf %32, %40 : vector<24x256xf32>
    %c1_i32 = arith.constant 1 : i32
    %42 = tpu.dynamic_rotate %13 by %c1_i32 dim 1 : vector<24x256xf32>, i32 -> vector<24x256xf32>
    %43 = vector.extract_strided_slice %15 {offsets = [3, 0, 0], sizes = [1, 1, 256], strides = [1, 1, 1]} : vector<9x1x256xf32> to vector<1x1x256xf32>
    %44 = vector.shape_cast %43 : vector<1x1x256xf32> to vector<1x256xf32>
    %45 = vector.extract_strided_slice %14 {offsets = [0, 3], sizes = [24, 1], strides = [1, 1]} : vector<24x9xf32> to vector<24x1xf32>
    %46 = vector.broadcast %44 : vector<1x256xf32> to vector<24x256xf32>
    %47 = vector.broadcast %45 : vector<24x1xf32> to vector<24x256xf32>
    %48 = arith.mulf %46, %47 : vector<24x256xf32>
    %49 = arith.mulf %42, %48 : vector<24x256xf32>
    %50 = arith.addf %41, %49 : vector<24x256xf32>
    %51 = vector.extract_strided_slice %15 {offsets = [4, 0, 0], sizes = [1, 1, 256], strides = [1, 1, 1]} : vector<9x1x256xf32> to vector<1x1x256xf32>
    %52 = vector.shape_cast %51 : vector<1x1x256xf32> to vector<1x256xf32>
    %53 = vector.extract_strided_slice %14 {offsets = [0, 4], sizes = [24, 1], strides = [1, 1]} : vector<24x9xf32> to vector<24x1xf32>
    %54 = vector.broadcast %52 : vector<1x256xf32> to vector<24x256xf32>
    %55 = vector.broadcast %53 : vector<24x1xf32> to vector<24x256xf32>
    %56 = arith.mulf %54, %55 : vector<24x256xf32>
    %57 = arith.mulf %13, %56 : vector<24x256xf32>
    %58 = arith.addf %50, %57 : vector<24x256xf32>
    %c255_i32 = arith.constant 255 : i32
    %59 = tpu.dynamic_rotate %13 by %c255_i32 dim 1 : vector<24x256xf32>, i32 -> vector<24x256xf32>
    %60 = vector.extract_strided_slice %15 {offsets = [5, 0, 0], sizes = [1, 1, 256], strides = [1, 1, 1]} : vector<9x1x256xf32> to vector<1x1x256xf32>
    %61 = vector.shape_cast %60 : vector<1x1x256xf32> to vector<1x256xf32>
    %62 = vector.extract_strided_slice %14 {offsets = [0, 5], sizes = [24, 1], strides = [1, 1]} : vector<24x9xf32> to vector<24x1xf32>
    %63 = vector.broadcast %61 : vector<1x256xf32> to vector<24x256xf32>
    %64 = vector.broadcast %62 : vector<24x1xf32> to vector<24x256xf32>
    %65 = arith.mulf %63, %64 : vector<24x256xf32>
    %66 = arith.mulf %59, %65 : vector<24x256xf32>
    %67 = arith.addf %58, %66 : vector<24x256xf32>
    %c241_i32 = arith.constant 241 : i32
    %68 = tpu.dynamic_rotate %13 by %c241_i32 dim 1 : vector<24x256xf32>, i32 -> vector<24x256xf32>
    %69 = vector.extract_strided_slice %15 {offsets = [6, 0, 0], sizes = [1, 1, 256], strides = [1, 1, 1]} : vector<9x1x256xf32> to vector<1x1x256xf32>
    %70 = vector.shape_cast %69 : vector<1x1x256xf32> to vector<1x256xf32>
    %71 = vector.extract_strided_slice %14 {offsets = [0, 6], sizes = [24, 1], strides = [1, 1]} : vector<24x9xf32> to vector<24x1xf32>
    %72 = vector.broadcast %70 : vector<1x256xf32> to vector<24x256xf32>
    %73 = vector.broadcast %71 : vector<24x1xf32> to vector<24x256xf32>
    %74 = arith.mulf %72, %73 : vector<24x256xf32>
    %75 = arith.mulf %68, %74 : vector<24x256xf32>
    %76 = arith.addf %67, %75 : vector<24x256xf32>
    %c240_i32 = arith.constant 240 : i32
    %77 = tpu.dynamic_rotate %13 by %c240_i32 dim 1 : vector<24x256xf32>, i32 -> vector<24x256xf32>
    %78 = vector.extract_strided_slice %15 {offsets = [7, 0, 0], sizes = [1, 1, 256], strides = [1, 1, 1]} : vector<9x1x256xf32> to vector<1x1x256xf32>
    %79 = vector.shape_cast %78 : vector<1x1x256xf32> to vector<1x256xf32>
    %80 = vector.extract_strided_slice %14 {offsets = [0, 7], sizes = [24, 1], strides = [1, 1]} : vector<24x9xf32> to vector<24x1xf32>
    %81 = vector.broadcast %79 : vector<1x256xf32> to vector<24x256xf32>
    %82 = vector.broadcast %80 : vector<24x1xf32> to vector<24x256xf32>
    %83 = arith.mulf %81, %82 : vector<24x256xf32>
    %84 = arith.mulf %77, %83 : vector<24x256xf32>
    %85 = arith.addf %76, %84 : vector<24x256xf32>
    %c239_i32 = arith.constant 239 : i32
    %86 = tpu.dynamic_rotate %13 by %c239_i32 dim 1 : vector<24x256xf32>, i32 -> vector<24x256xf32>
    %87 = vector.extract_strided_slice %15 {offsets = [8, 0, 0], sizes = [1, 1, 256], strides = [1, 1, 1]} : vector<9x1x256xf32> to vector<1x1x256xf32>
    %88 = vector.shape_cast %87 : vector<1x1x256xf32> to vector<1x256xf32>
    %89 = vector.extract_strided_slice %14 {offsets = [0, 8], sizes = [24, 1], strides = [1, 1]} : vector<24x9xf32> to vector<24x1xf32>
    %90 = vector.broadcast %88 : vector<1x256xf32> to vector<24x256xf32>
    %91 = vector.broadcast %89 : vector<24x1xf32> to vector<24x256xf32>
    %92 = arith.mulf %90, %91 : vector<24x256xf32>
    %93 = arith.mulf %86, %92 : vector<24x256xf32>
    %94 = arith.addf %85, %93 : vector<24x256xf32>
    %c0_12 = arith.constant 0 : index
    %c0_13 = arith.constant 0 : index
    %95 = vector.load %arg6[%c0_12, %c0_13] : memref<24x1xf32, #tpu.memory_space<vmem>>, vector<24x1xf32>
    %96 = vector.broadcast %95 : vector<24x1xf32> to vector<24x256xf32>
    %97 = arith.addf %94, %96 : vector<24x256xf32>
    %cst_14 = arith.constant 0.000000e+00 : f32
    %98 = vector.broadcast %cst_14 : f32 to vector<24x256xf32>
    %99 = arith.maximumf %97, %98 : vector<24x256xf32>
    %c0_15 = arith.constant 0 : index
    %c0_16 = arith.constant 0 : index
    %100 = vector.load %arg7[%c0_15, %c0_16] : memref<24x24xbf16, #tpu.memory_space<vmem>>, vector<24x24xbf16>
    %101 = arith.truncf %99 : vector<24x256xf32> to vector<24x256xbf16>
    %cst_17 = arith.constant dense<0.000000e+00> : vector<24x256xf32>
    %102 = tpu.matmul %100, %101, %cst_17 {dimension_numbers = #tpu.dot_dimension_numbers<[1], [0], [0], [1], [0, 0, 1, 1], [], []>} : vector<24x24xbf16>, vector<24x256xbf16>, vector<24x256xf32> -> vector<24x256xf32>
    %c0_18 = arith.constant 0 : index
    %c0_19 = arith.constant 0 : index
    %103 = vector.load %arg8[%c0_18, %c0_19] : memref<24x1xf32, #tpu.memory_space<vmem>>, vector<24x1xf32>
    %104 = vector.broadcast %103 : vector<24x1xf32> to vector<24x256xf32>
    %105 = arith.addf %102, %104 : vector<24x256xf32>
    %cst_20 = arith.constant 0.000000e+00 : f32
    %106 = vector.broadcast %cst_20 : f32 to vector<24x256xf32>
    %107 = arith.maximumf %105, %106 : vector<24x256xf32>
    %c0_21 = arith.constant 0 : index
    %c0_22 = arith.constant 0 : index
    %108 = vector.load %arg9[%c0_21, %c0_22] : memref<24x1xf32, #tpu.memory_space<vmem>>, vector<24x1xf32>
    %109 = vector.broadcast %108 : vector<24x1xf32> to vector<24x256xf32>
    %110 = arith.mulf %107, %109 : vector<24x256xf32>
    %c0_23 = arith.constant 0 : index
    %c0_24 = arith.constant 0 : index
    %111 = vector.load %arg10[%c0_23, %c0_24] : memref<24x1xf32, #tpu.memory_space<vmem>>, vector<24x1xf32>
    %112 = vector.broadcast %111 : vector<24x1xf32> to vector<24x256xf32>
    %113 = arith.addf %110, %112 : vector<24x256xf32>
    %114 = arith.negf %113 : vector<24x256xf32>
    %115 = math.exp %114 : vector<24x256xf32>
    %cst_25 = arith.constant 1.000000e+00 : f32
    %116 = vector.broadcast %cst_25 : f32 to vector<24x256xf32>
    %117 = arith.addf %116, %115 : vector<24x256xf32>
    %118 = arith.divf %116, %117 : vector<24x256xf32>
    %119 = arith.addf %113, %118 : vector<24x256xf32>
    %cst_26 = arith.constant dense<0.000000e+00> : vector<24xf32>
    %120 = vector.multi_reduction <add>, %119, %cst_26 [1] : vector<24x256xf32> to vector<24xf32>
    %121 = vector.shape_cast %120 : vector<24xf32> to vector<24x1xf32>
    %cst_27 = arith.constant 2.560000e+02 : f32
    %122 = vector.broadcast %cst_27 : f32 to vector<24x1xf32>
    %123 = arith.divf %121, %122 : vector<24x1xf32>
    %c0_28 = arith.constant 0 : index
    %c0_29 = arith.constant 0 : index
    %124 = vector.load %arg11[%c0_28, %c0_29] : memref<96x24xf32, #tpu.memory_space<vmem>>, vector<96x24xf32>
    %cst_30 = arith.constant dense<0.000000e+00> : vector<96x1xf32>
    %125 = tpu.matmul %124, %123, %cst_30 {dimension_numbers = #tpu.dot_dimension_numbers<[1], [0], [0], [1], [0, 0, 1, 1], [], []>} : vector<96x24xf32>, vector<24x1xf32>, vector<96x1xf32> -> vector<96x1xf32>
    %c0_31 = arith.constant 0 : index
    %c0_32 = arith.constant 0 : index
    %126 = vector.load %arg12[%c0_31, %c0_32] : memref<96x1xf32, #tpu.memory_space<vmem>>, vector<96x1xf32>
    %127 = arith.addf %125, %126 : vector<96x1xf32>
    %128 = arith.negf %127 : vector<96x1xf32>
    %129 = math.exp %128 : vector<96x1xf32>
    %cst_33 = arith.constant 1.000000e+00 : f32
    %130 = vector.broadcast %cst_33 : f32 to vector<96x1xf32>
    %131 = arith.addf %130, %129 : vector<96x1xf32>
    %132 = arith.divf %130, %131 : vector<96x1xf32>
    %133 = arith.addf %127, %132 : vector<96x1xf32>
    %c0_34 = arith.constant 0 : index
    %c0_35 = arith.constant 0 : index
    %134 = vector.load %arg13[%c0_34, %c0_35] : memref<24x96xf32, #tpu.memory_space<vmem>>, vector<24x96xf32>
    %cst_36 = arith.constant dense<0.000000e+00> : vector<24x1xf32>
    %135 = tpu.matmul %134, %133, %cst_36 {dimension_numbers = #tpu.dot_dimension_numbers<[1], [0], [0], [1], [0, 0, 1, 1], [], []>} : vector<24x96xf32>, vector<96x1xf32>, vector<24x1xf32> -> vector<24x1xf32>
    %c0_37 = arith.constant 0 : index
    %c0_38 = arith.constant 0 : index
    %136 = vector.load %arg14[%c0_37, %c0_38] : memref<24x1xf32, #tpu.memory_space<vmem>>, vector<24x1xf32>
    %137 = arith.addf %135, %136 : vector<24x1xf32>
    %138 = arith.negf %137 : vector<24x1xf32>
    %139 = math.exp %138 : vector<24x1xf32>
    %cst_39 = arith.constant 1.000000e+00 : f32
    %140 = vector.broadcast %cst_39 : f32 to vector<24x1xf32>
    %141 = arith.addf %140, %139 : vector<24x1xf32>
    %142 = arith.divf %140, %141 : vector<24x1xf32>
    %143 = vector.broadcast %142 : vector<24x1xf32> to vector<24x256xf32>
    %144 = arith.mulf %119, %143 : vector<24x256xf32>
    %c0_40 = arith.constant 0 : index
    %c0_41 = arith.constant 0 : index
    %145 = vector.load %arg15[%c0_40, %c0_41] : memref<4x24xbf16, #tpu.memory_space<vmem>>, vector<4x24xbf16>
    %146 = arith.truncf %144 : vector<24x256xf32> to vector<24x256xbf16>
    %cst_42 = arith.constant dense<0.000000e+00> : vector<4x256xf32>
    %147 = tpu.matmul %145, %146, %cst_42 {dimension_numbers = #tpu.dot_dimension_numbers<[1], [0], [0], [1], [0, 0, 1, 1], [], []>} : vector<4x24xbf16>, vector<24x256xbf16>, vector<4x256xf32> -> vector<4x256xf32>
    %c0_43 = arith.constant 0 : index
    %c0_44 = arith.constant 0 : index
    %148 = vector.load %arg16[%c0_43, %c0_44] : memref<4x1xf32, #tpu.memory_space<vmem>>, vector<4x1xf32>
    %149 = vector.broadcast %148 : vector<4x1xf32> to vector<4x256xf32>
    %150 = arith.addf %147, %149 : vector<4x256xf32>
    %151 = arith.addf %150, %1 : vector<4x256xf32>
    %152 = vector.shape_cast %151 : vector<4x256xf32> to vector<1x4x256xf32>
    %c0_45 = arith.constant 0 : index
    %c0_46 = arith.constant 0 : index
    %c0_47 = arith.constant 0 : index
    %153 = vector.load %arg17[%c0_45, %c0_46, %c0_47] : memref<1x4x256xf32, #tpu.memory_space<vmem>>, vector<1x4x256xf32>
    tpu.vector_store %arg17[%c0_45, %c0_46, %c0_47], %152 {strides = array<i32>} : memref<1x4x256xf32, #tpu.memory_space<vmem>>, vector<1x4x256xf32>,
    return
  }
  func.func @transform_0(%arg0: i32) -> (i32, i32, i32) {
    %c0_i32 = arith.constant 0 : i32
    %c0_i32_0 = arith.constant 0 : i32
    %c0_i32_1 = arith.constant 0 : i32
    return %arg0, %c0_i32, %c0_i32_0 : i32, i32, i32
  }
  func.func @transform_1(%arg0: i32) -> (i32, i32, i32) {
    %c0_i32 = arith.constant 0 : i32
    %c0_i32_0 = arith.constant 0 : i32
    %c0_i32_1 = arith.constant 0 : i32
    %c0_i32_2 = arith.constant 0 : i32
    return %c0_i32, %c0_i32_0, %c0_i32_1 : i32, i32, i32
  }
  func.func @transform_2(%arg0: i32) -> (i32, i32) {
    %c0_i32 = arith.constant 0 : i32
    %c0_i32_0 = arith.constant 0 : i32
    %c0_i32_1 = arith.constant 0 : i32
    return %c0_i32, %c0_i32_0 : i32, i32
  }
  func.func @transform_3(%arg0: i32) -> (i32, i32) {
    %c0_i32 = arith.constant 0 : i32
    %c0_i32_0 = arith.constant 0 : i32
    %c0_i32_1 = arith.constant 0 : i32
    return %c0_i32, %c0_i32_0 : i32, i32
  }
  func.func @transform_4(%arg0: i32) -> (i32, i32) {
    %c0_i32 = arith.constant 0 : i32
    %c0_i32_0 = arith.constant 0 : i32
    %c0_i32_1 = arith.constant 0 : i32
    return %c0_i32, %c0_i32_0 : i32, i32
  }
  func.func @transform_5(%arg0: i32) -> (i32, i32) {
    %c0_i32 = arith.constant 0 : i32
    %c0_i32_0 = arith.constant 0 : i32
    %c0_i32_1 = arith.constant 0 : i32
    return %c0_i32, %c0_i32_0 : i32, i32
  }
  func.func @transform_6(%arg0: i32) -> (i32, i32) {
    %c0_i32 = arith.constant 0 : i32
    %c0_i32_0 = arith.constant 0 : i32
    %c0_i32_1 = arith.constant 0 : i32
    return %c0_i32, %c0_i32_0 : i32, i32
  }
  func.func @transform_7(%arg0: i32) -> (i32, i32) {
    %c0_i32 = arith.constant 0 : i32
    %c0_i32_0 = arith.constant 0 : i32
    %c0_i32_1 = arith.constant 0 : i32
    return %c0_i32, %c0_i32_0 : i32, i32
  }
  func.func @transform_8(%arg0: i32) -> (i32, i32) {
    %c0_i32 = arith.constant 0 : i32
    %c0_i32_0 = arith.constant 0 : i32
    %c0_i32_1 = arith.constant 0 : i32
    return %c0_i32, %c0_i32_0 : i32, i32
  }
  func.func @transform_9(%arg0: i32) -> (i32, i32) {
    %c0_i32 = arith.constant 0 : i32
    %c0_i32_0 = arith.constant 0 : i32
    %c0_i32_1 = arith.constant 0 : i32
    return %c0_i32, %c0_i32_0 : i32, i32
  }
  func.func @transform_10(%arg0: i32) -> (i32, i32) {
    %c0_i32 = arith.constant 0 : i32
    %c0_i32_0 = arith.constant 0 : i32
    %c0_i32_1 = arith.constant 0 : i32
    return %c0_i32, %c0_i32_0 : i32, i32
  }
  func.func @transform_11(%arg0: i32) -> (i32, i32) {
    %c0_i32 = arith.constant 0 : i32
    %c0_i32_0 = arith.constant 0 : i32
    %c0_i32_1 = arith.constant 0 : i32
    return %c0_i32, %c0_i32_0 : i32, i32
  }
  func.func @transform_12(%arg0: i32) -> (i32, i32) {
    %c0_i32 = arith.constant 0 : i32
    %c0_i32_0 = arith.constant 0 : i32
    %c0_i32_1 = arith.constant 0 : i32
    return %c0_i32, %c0_i32_0 : i32, i32
  }
  func.func @transform_13(%arg0: i32) -> (i32, i32) {
    %c0_i32 = arith.constant 0 : i32
    %c0_i32_0 = arith.constant 0 : i32
    %c0_i32_1 = arith.constant 0 : i32
    return %c0_i32, %c0_i32_0 : i32, i32
  }
  func.func @transform_14(%arg0: i32) -> (i32, i32) {
    %c0_i32 = arith.constant 0 : i32
    %c0_i32_0 = arith.constant 0 : i32
    %c0_i32_1 = arith.constant 0 : i32
    return %c0_i32, %c0_i32_0 : i32, i32
  }
  func.func @transform_15(%arg0: i32) -> (i32, i32) {
    %c0_i32 = arith.constant 0 : i32
    %c0_i32_0 = arith.constant 0 : i32
    %c0_i32_1 = arith.constant 0 : i32
    return %c0_i32, %c0_i32_0 : i32, i32
  }
  func.func @transform_16(%arg0: i32) -> (i32, i32, i32) {
    %c0_i32 = arith.constant 0 : i32
    %c0_i32_0 = arith.constant 0 : i32
    %c0_i32_1 = arith.constant 0 : i32
    return %arg0, %c0_i32, %c0_i32_0 : i32, i32, i32
  }
}

</mosaic_0001>

<llo_original>
// kernel: tpu_custom_call.1
$region0: #{tpu_custom_call.1}
  #allocation0 [shape = 'u32[]', space=smem, size = 0x4, offset = 0x4, fixed_abs, tag = 'smem constant byte address 0x4 - core index']
  #allocation1 [shape = 'u32[72,128]{1,0:T(1,128)}', space=vmem, size = 0x9000, scoped, tag = 'internal scratch']
  %s0 = inlined_call_operand.vmem [shape: f32[2,4,256], index: 0, kind: input, shape index: {}]
  %s1 = inlined_call_operand.vmem [shape: f32[9,1,256], index: 1, kind: input, shape index: {}]
  %s2 = inlined_call_operand.vmem [shape: bf16[24,4], index: 2, kind: input, shape index: {}]
  %s3 = inlined_call_operand.vmem [shape: f32[24,1], index: 3, kind: input, shape index: {}]
  %s4 = inlined_call_operand.vmem [shape: f32[24,9], index: 4, kind: input, shape index: {}]
  %s5 = inlined_call_operand.vmem [shape: f32[24,1], index: 5, kind: input, shape index: {}]
  %s6 = inlined_call_operand.vmem [shape: bf16[24,24], index: 6, kind: input, shape index: {}]
  %s7 = inlined_call_operand.vmem [shape: f32[24,1], index: 7, kind: input, shape index: {}]
  %s8 = inlined_call_operand.vmem [shape: f32[24,1], index: 8, kind: input, shape index: {}]
  %s9 = inlined_call_operand.vmem [shape: f32[24,1], index: 9, kind: input, shape index: {}]
  %s10 = inlined_call_operand.vmem [shape: f32[96,24], index: 10, kind: input, shape index: {}]
  %s11 = inlined_call_operand.vmem [shape: f32[96,1], index: 11, kind: input, shape index: {}]
  %s12 = inlined_call_operand.vmem [shape: f32[24,96], index: 12, kind: input, shape index: {}]
  %s13 = inlined_call_operand.vmem [shape: f32[24,1], index: 13, kind: input, shape index: {}]
  %s14 = inlined_call_operand.vmem [shape: bf16[4,24], index: 14, kind: input, shape index: {}]
  %s15 = inlined_call_operand.vmem [shape: f32[4,1], index: 15, kind: input, shape index: {}]
  %s16 = inlined_call_operand.hbm [shape: f32[2,4,256], index: 16, kind: output, shape index: {}]
  %s17 = sld [smem:[#allocation0]]
  $region97: #{tpu_custom_call.1} parent=0
    _
  %s19 = ssub.s32 1, %s17
  %s20 = scalar_select 0, %s19, %s17
  $region1: #{tpu_custom_call.1} parent=0
    #allocation2 [shape = 'u8[8192]{0}', space=vmem, size = 0x2000, scoped, tag = 'output window, operand 0']
    #allocation3 [shape = 's32[2]{0}', space=sflag, size = 0x8, scoped, tag = 'scoped memory for tpu_custom_call.1']
    %21 = vsyncpa [#allocation3], 0
    %s22 = scalar_lea.sflag [#allocation3], 1
    %23 = vsyncpa %s22, 0
    loop: start=0, step=1, limit=4
    $region2: #{tpu_custom_call.1} parent=1 // loop_pre_header
      _
    $region3: #{tpu_custom_call.1} parent=1 // loop_header
      %s25 = sphi 0, %s29
      %p26 = scmp.ge.s32.totalorder %s25, 4
      %s35 = sphi 0, %s37
      %s38 = sphi 0, %s35
      %s39 = sphi 0, %s38
      %s55 = sphi 0, %s39
      %s59 = sphi 0, %s59
      %s61 = sphi 0, %s59
      %s62 = sphi 0, %s61
      %s76 = sphi 0, %s62
      %s80 = sphi 0, %s80
      %s82 = sphi 0, %s80
      %s83 = sphi 0, %s82
      %s97 = sphi 0, %s83
      %s101 = sphi 0, %s101
      %s103 = sphi 0, %s101
      %s104 = sphi 0, %s103
      %s118 = sphi 0, %s104
      %s122 = sphi 0, %s122
      %s124 = sphi 0, %s122
      %s125 = sphi 0, %s124
      %s139 = sphi 0, %s125
      %s143 = sphi 0, %s143
      %s145 = sphi 0, %s143
      %s146 = sphi 0, %s145
      %s160 = sphi 0, %s146
      %s164 = sphi 0, %s164
      %s166 = sphi 0, %s164
      %s167 = sphi 0, %s166
      %s181 = sphi 0, %s167
      %s185 = sphi 0, %s185
      %s187 = sphi 0, %s185
      %s188 = sphi 0, %s187
      %s202 = sphi 0, %s188
      %s206 = sphi 0, %s206
      %s208 = sphi 0, %s206
      %s209 = sphi 0, %s208
      %s223 = sphi 0, %s209
      %s227 = sphi 0, %s227
      %s229 = sphi 0, %s227
      %s230 = sphi 0, %s229
      %s244 = sphi 0, %s230
      %s248 = sphi 0, %s248
      %s250 = sphi 0, %s248
      %s251 = sphi 0, %s250
      %s265 = sphi 0, %s251
      %s269 = sphi 0, %s269
      %s271 = sphi 0, %s269
      %s272 = sphi 0, %s271
      %s286 = sphi 0, %s272
      %s290 = sphi 0, %s290
      %s292 = sphi 0, %s290
      %s293 = sphi 0, %s292
      %s307 = sphi 0, %s293
      %s311 = sphi 0, %s311
      %s313 = sphi 0, %s311
      %s314 = sphi 0, %s313
      %s328 = sphi 0, %s314
      %s332 = sphi 0, %s332
      %s334 = sphi 0, %s332
      %s335 = sphi 0, %s334
      %s349 = sphi 0, %s335
      %s353 = sphi 0, %s353
      %s355 = sphi 0, %s353
      %s356 = sphi 0, %s355
      %s370 = sphi 0, %s356
      %s376 = sphi 0, %s378
      %s379 = sphi 0, %s376
      %s380 = sphi 0, %s379
      %s396 = sphi 0, %s380
    $region4: #{tpu_custom_call.1} parent=1 // loop_header_branch
      %28 = sbr.rel (%p26) target = $region8
    $region5: #{tpu_custom_call.1} parent=1 // loop_body
      %s30 = ssub.s32 %s25, 1
      %s31 = ssub.s32 %s25, 2
      %s32 = sadd.s32 %s25, 1
      %s33 = ssub.s32 %s25, %s32
      %p34 = scmp.eq.s32.totalorder %s33, 0
      %s36 = sadd.s32 %s35, 1
      %s37 = scalar_select %p34, %s35, %s36
      %p40 = pneg %p34
      %p41 = scmp.eq.s32.totalorder %s25, 1
      %p42 = por %p40, %p41
      %p43 = scmp.ne.s32.totalorder %s35, %s38
      %p44 = scmp.eq.s32.totalorder %s25, 0
      %p45 = por %p43, %p44
      %p46 = scmp.ne.s32.totalorder %s35, %s38
      %p47 = scmp.eq.s32.totalorder %s30, 1
      %p48 = por %p46, %p47
      %p49 = scmp.ne.s32.totalorder %s38, %s39
      %p50 = scmp.eq.s32.totalorder %s30, 0
      %p51 = por %p49, %p50
      %p52 = scmp.ne.s32.totalorder %s38, %s39
      %p53 = scmp.eq.s32.totalorder %s31, 1
      %p54 = por %p52, %p53
      %p56 = scmp.ne.s32.totalorder %s39, %s55
      %p57 = scmp.eq.s32.totalorder %s31, 0
      %p58 = por %p56, %p57
      %s60 = sadd.s32 %s59, 1
      %p63 = scmp.eq.s32.totalorder %s25, 1
      %p64 = scmp.ne.s32.totalorder %s59, %s61
      %p65 = scmp.eq.s32.totalorder %s25, 0
      %p66 = por %p64, %p65
      %p67 = scmp.ne.s32.totalorder %s59, %s61
      %p68 = scmp.eq.s32.totalorder %s30, 1
      %p69 = por %p67, %p68
      %p70 = scmp.ne.s32.totalorder %s61, %s62
      %p71 = scmp.eq.s32.totalorder %s30, 0
      %p72 = por %p70, %p71
      %p73 = scmp.ne.s32.totalorder %s61, %s62
      %p74 = scmp.eq.s32.totalorder %s31, 1
      %p75 = por %p73, %p74
      %p77 = scmp.ne.s32.totalorder %s62, %s76
      %p78 = scmp.eq.s32.totalorder %s31, 0
      %p79 = por %p77, %p78
      %s81 = sadd.s32 %s80, 1
      %p84 = scmp.eq.s32.totalorder %s25, 1
      %p85 = scmp.ne.s32.totalorder %s80, %s82
      %p86 = scmp.eq.s32.totalorder %s25, 0
      %p87 = por %p85, %p86
      %p88 = scmp.ne.s32.totalorder %s80, %s82
      %p89 = scmp.eq.s32.totalorder %s30, 1
      %p90 = por %p88, %p89
      %p91 = scmp.ne.s32.totalorder %s82, %s83
      %p92 = scmp.eq.s32.totalorder %s30, 0
      %p93 = por %p91, %p92
      %p94 = scmp.ne.s32.totalorder %s82, %s83
      %p95 = scmp.eq.s32.totalorder %s31, 1
      %p96 = por %p94, %p95
      %p98 = scmp.ne.s32.totalorder %s83, %s97
      %p99 = scmp.eq.s32.totalorder %s31, 0
      %p100 = por %p98, %p99
      %s102 = sadd.s32 %s101, 1
      %p105 = scmp.eq.s32.totalorder %s25, 1
      %p106 = scmp.ne.s32.totalorder %s101, %s103
      %p107 = scmp.eq.s32.totalorder %s25, 0
      %p108 = por %p106, %p107
      %p109 = scmp.ne.s32.totalorder %s101, %s103
      %p110 = scmp.eq.s32.totalorder %s30, 1
      %p111 = por %p109, %p110
      %p112 = scmp.ne.s32.totalorder %s103, %s104
      %p113 = scmp.eq.s32.totalorder %s30, 0
      %p114 = por %p112, %p113
      %p115 = scmp.ne.s32.totalorder %s103, %s104
      %p116 = scmp.eq.s32.totalorder %s31, 1
      %p117 = por %p115, %p116
      %p119 = scmp.ne.s32.totalorder %s104, %s118
      %p120 = scmp.eq.s32.totalorder %s31, 0
      %p121 = por %p119, %p120
      %s123 = sadd.s32 %s122, 1
      %p126 = scmp.eq.s32.totalorder %s25, 1
      %p127 = scmp.ne.s32.totalorder %s122, %s124
      %p128 = scmp.eq.s32.totalorder %s25, 0
      %p129 = por %p127, %p128
      %p130 = scmp.ne.s32.totalorder %s122, %s124
      %p131 = scmp.eq.s32.totalorder %s30, 1
      %p132 = por %p130, %p131
      %p133 = scmp.ne.s32.totalorder %s124, %s125
      %p134 = scmp.eq.s32.totalorder %s30, 0
      %p135 = por %p133, %p134
      %p136 = scmp.ne.s32.totalorder %s124, %s125
      %p137 = scmp.eq.s32.totalorder %s31, 1
      %p138 = por %p136, %p137
      %p140 = scmp.ne.s32.totalorder %s125, %s139
      %p141 = scmp.eq.s32.totalorder %s31, 0
      %p142 = por %p140, %p141
      %s144 = sadd.s32 %s143, 1
      %p147 = scmp.eq.s32.totalorder %s25, 1
      %p148 = scmp.ne.s32.totalorder %s143, %s145
      %p149 = scmp.eq.s32.totalorder %s25, 0
      %p150 = por %p148, %p149
      %p151 = scmp.ne.s32.totalorder %s143, %s145
      %p152 = scmp.eq.s32.totalorder %s30, 1
      %p153 = por %p151, %p152
      %p154 = scmp.ne.s32.totalorder %s145, %s146
      %p155 = scmp.eq.s32.totalorder %s30, 0
      %p156 = por %p154, %p155
      %p157 = scmp.ne.s32.totalorder %s145, %s146
      %p158 = scmp.eq.s32.totalorder %s31, 1
      %p159 = por %p157, %p158
      %p161 = scmp.ne.s32.totalorder %s146, %s160
      %p162 = scmp.eq.s32.totalorder %s31, 0
      %p163 = por %p161, %p162
      %s165 = sadd.s32 %s164, 1
      %p168 = scmp.eq.s32.totalorder %s25, 1
      %p169 = scmp.ne.s32.totalorder %s164, %s166
      %p170 = scmp.eq.s32.totalorder %s25, 0
      %p171 = por %p169, %p170
      %p172 = scmp.ne.s32.totalorder %s164, %s166
      %p173 = scmp.eq.s32.totalorder %s30, 1
      %p174 = por %p172, %p173
      %p175 = scmp.ne.s32.totalorder %s166, %s167
      %p176 = scmp.eq.s32.totalorder %s30, 0
      %p177 = por %p175, %p176
      %p178 = scmp.ne.s32.totalorder %s166, %s167
      %p179 = scmp.eq.s32.totalorder %s31, 1
      %p180 = por %p178, %p179
      %p182 = scmp.ne.s32.totalorder %s167, %s181
      %p183 = scmp.eq.s32.totalorder %s31, 0
      %p184 = por %p182, %p183
      %s186 = sadd.s32 %s185, 1
      %p189 = scmp.eq.s32.totalorder %s25, 1
      %p190 = scmp.ne.s32.totalorder %s185, %s187
      %p191 = scmp.eq.s32.totalorder %s25, 0
      %p192 = por %p190, %p191
      %p193 = scmp.ne.s32.totalorder %s185, %s187
      %p194 = scmp.eq.s32.totalorder %s30, 1
      %p195 = por %p193, %p194
      %p196 = scmp.ne.s32.totalorder %s187, %s188
      %p197 = scmp.eq.s32.totalorder %s30, 0
      %p198 = por %p196, %p197
      %p199 = scmp.ne.s32.totalorder %s187, %s188
      %p200 = scmp.eq.s32.totalorder %s31, 1
      %p201 = por %p199, %p200
      %p203 = scmp.ne.s32.totalorder %s188, %s202
      %p204 = scmp.eq.s32.totalorder %s31, 0
      %p205 = por %p203, %p204
      %s207 = sadd.s32 %s206, 1
      %p210 = scmp.eq.s32.totalorder %s25, 1
      %p211 = scmp.ne.s32.totalorder %s206, %s208
      %p212 = scmp.eq.s32.totalorder %s25, 0
      %p213 = por %p211, %p212
      %p214 = scmp.ne.s32.totalorder %s206, %s208
      %p215 = scmp.eq.s32.totalorder %s30, 1
      %p216 = por %p214, %p215
      %p217 = scmp.ne.s32.totalorder %s208, %s209
      %p218 = scmp.eq.s32.totalorder %s30, 0
      %p219 = por %p217, %p218
      %p220 = scmp.ne.s32.totalorder %s208, %s209
      %p221 = scmp.eq.s32.totalorder %s31, 1
      %p222 = por %p220, %p221
      %p224 = scmp.ne.s32.totalorder %s209, %s223
      %p225 = scmp.eq.s32.totalorder %s31, 0
      %p226 = por %p224, %p225
      %s228 = sadd.s32 %s227, 1
      %p231 = scmp.eq.s32.totalorder %s25, 1
      %p232 = scmp.ne.s32.totalorder %s227, %s229
      %p233 = scmp.eq.s32.totalorder %s25, 0
      %p234 = por %p232, %p233
      %p235 = scmp.ne.s32.totalorder %s227, %s229
      %p236 = scmp.eq.s32.totalorder %s30, 1
      %p237 = por %p235, %p236
      %p238 = scmp.ne.s32.totalorder %s229, %s230
      %p239 = scmp.eq.s32.totalorder %s30, 0
      %p240 = por %p238, %p239
      %p241 = scmp.ne.s32.totalorder %s229, %s230
      %p242 = scmp.eq.s32.totalorder %s31, 1
      %p243 = por %p241, %p242
      %p245 = scmp.ne.s32.totalorder %s230, %s244
      %p246 = scmp.eq.s32.totalorder %s31, 0
      %p247 = por %p245, %p246
      %s249 = sadd.s32 %s248, 1
      %p252 = scmp.eq.s32.totalorder %s25, 1
      %p253 = scmp.ne.s32.totalorder %s248, %s250
      %p254 = scmp.eq.s32.totalorder %s25, 0
      %p255 = por %p253, %p254
      %p256 = scmp.ne.s32.totalorder %s248, %s250
      %p257 = scmp.eq.s32.totalorder %s30, 1
      %p258 = por %p256, %p257
      %p259 = scmp.ne.s32.totalorder %s250, %s251
      %p260 = scmp.eq.s32.totalorder %s30, 0
      %p261 = por %p259, %p260
      %p262 = scmp.ne.s32.totalorder %s250, %s251
      %p263 = scmp.eq.s32.totalorder %s31, 1
      %p264 = por %p262, %p263
      %p266 = scmp.ne.s32.totalorder %s251, %s265
      %p267 = scmp.eq.s32.totalorder %s31, 0
      %p268 = por %p266, %p267
      %s270 = sadd.s32 %s269, 1
      %p273 = scmp.eq.s32.totalorder %s25, 1
      %p274 = scmp.ne.s32.totalorder %s269, %s271
      %p275 = scmp.eq.s32.totalorder %s25, 0
      %p276 = por %p274, %p275
      %p277 = scmp.ne.s32.totalorder %s269, %s271
      %p278 = scmp.eq.s32.totalorder %s30, 1
      %p279 = por %p277, %p278
      %p280 = scmp.ne.s32.totalorder %s271, %s272
      %p281 = scmp.eq.s32.totalorder %s30, 0
      %p282 = por %p280, %p281
      %p283 = scmp.ne.s32.totalorder %s271, %s272
      %p284 = scmp.eq.s32.totalorder %s31, 1
      %p285 = por %p283, %p284
      %p287 = scmp.ne.s32.totalorder %s272, %s286
      %p288 = scmp.eq.s32.totalorder %s31, 0
      %p289 = por %p287, %p288
      %s291 = sadd.s32 %s290, 1
      %p294 = scmp.eq.s32.totalorder %s25, 1
      %p295 = scmp.ne.s32.totalorder %s290, %s292
      %p296 = scmp.eq.s32.totalorder %s25, 0
      %p297 = por %p295, %p296
      %p298 = scmp.ne.s32.totalorder %s290, %s292
      %p299 = scmp.eq.s32.totalorder %s30, 1
      %p300 = por %p298, %p299
      %p301 = scmp.ne.s32.totalorder %s292, %s293
      %p302 = scmp.eq.s32.totalorder %s30, 0
      %p303 = por %p301, %p302
      %p304 = scmp.ne.s32.totalorder %s292, %s293
      %p305 = scmp.eq.s32.totalorder %s31, 1
      %p306 = por %p304, %p305
      %p308 = scmp.ne.s32.totalorder %s293, %s307
      %p309 = scmp.eq.s32.totalorder %s31, 0
      %p310 = por %p308, %p309
      %s312 = sadd.s32 %s311, 1
      %p315 = scmp.eq.s32.totalorder %s25, 1
      %p316 = scmp.ne.s32.totalorder %s311, %s313
      %p317 = scmp.eq.s32.totalorder %s25, 0
      %p318 = por %p316, %p317
      %p319 = scmp.ne.s32.totalorder %s311, %s313
      %p320 = scmp.eq.s32.totalorder %s30, 1
      %p321 = por %p319, %p320
      %p322 = scmp.ne.s32.totalorder %s313, %s314
      %p323 = scmp.eq.s32.totalorder %s30, 0
      %p324 = por %p322, %p323
      %p325 = scmp.ne.s32.totalorder %s313, %s314
      %p326 = scmp.eq.s32.totalorder %s31, 1
      %p327 = por %p325, %p326
      %p329 = scmp.ne.s32.totalorder %s314, %s328
      %p330 = scmp.eq.s32.totalorder %s31, 0
      %p331 = por %p329, %p330
      %s333 = sadd.s32 %s332, 1
      %p336 = scmp.eq.s32.totalorder %s25, 1
      %p337 = scmp.ne.s32.totalorder %s332, %s334
      %p338 = scmp.eq.s32.totalorder %s25, 0
      %p339 = por %p337, %p338
      %p340 = scmp.ne.s32.totalorder %s332, %s334
      %p341 = scmp.eq.s32.totalorder %s30, 1
      %p342 = por %p340, %p341
      %p343 = scmp.ne.s32.totalorder %s334, %s335
      %p344 = scmp.eq.s32.totalorder %s30, 0
      %p345 = por %p343, %p344
      %p346 = scmp.ne.s32.totalorder %s334, %s335
      %p347 = scmp.eq.s32.totalorder %s31, 1
      %p348 = por %p346, %p347
      %p350 = scmp.ne.s32.totalorder %s335, %s349
      %p351 = scmp.eq.s32.totalorder %s31, 0
      %p352 = por %p350, %p351
      %s354 = sadd.s32 %s353, 1
      %p357 = scmp.eq.s32.totalorder %s25, 1
      %p358 = scmp.ne.s32.totalorder %s353, %s355
      %p359 = scmp.eq.s32.totalorder %s25, 0
      %p360 = por %p358, %p359
      %p361 = scmp.ne.s32.totalorder %s353, %s355
      %p362 = scmp.eq.s32.totalorder %s30, 1
      %p363 = por %p361, %p362
      %p364 = scmp.ne.s32.totalorder %s355, %s356
      %p365 = scmp.eq.s32.totalorder %s30, 0
      %p366 = por %p364, %p365
      %p367 = scmp.ne.s32.totalorder %s355, %s356
      %p368 = scmp.eq.s32.totalorder %s31, 1
      %p369 = por %p367, %p368
      %p371 = scmp.ne.s32.totalorder %s356, %s370
      %p372 = scmp.eq.s32.totalorder %s31, 0
      %p373 = por %p371, %p372
      %s374 = ssub.s32 %s25, %s32
      %p375 = scmp.eq.s32.totalorder %s374, 0
      %s377 = sadd.s32 %s376, 1
      %s378 = scalar_select %p375, %s376, %s377
      %p381 = pneg %p375
      %p382 = scmp.eq.s32.totalorder %s25, 1
      %p383 = por %p381, %p382
      %p384 = scmp.ne.s32.totalorder %s376, %s379
      %p385 = scmp.eq.s32.totalorder %s25, 0
      %p386 = por %p384, %p385
      %p387 = scmp.ne.s32.totalorder %s376, %s379
      %p388 = scmp.eq.s32.totalorder %s30, 1
      %p389 = por %p387, %p388
      %p390 = scmp.ne.s32.totalorder %s379, %s380
      %p391 = scmp.eq.s32.totalorder %s30, 0
      %p392 = por %p390, %p391
      %p393 = scmp.ne.s32.totalorder %s379, %s380
      %p394 = scmp.eq.s32.totalorder %s31, 1
      %p395 = por %p393, %p394
      %p397 = scmp.ne.s32.totalorder %s380, %s396
      %p398 = scmp.eq.s32.totalorder %s31, 0
      %p399 = por %p397, %p398
      %p400 = scmp.le.s32.totalorder 1, %s25
      %p401 = scmp.lt.s32.totalorder %s25, 3
      %p402 = pnand %p400, %p401
      %p403 = pneg %p402
      // Predicated region
      $region9: #{tpu_custom_call.1} parent=5 // pred_check
        _
      $region10: #{tpu_custom_call.1} parent=5 // pred_check_branch
        %405 = sbr.rel (%p402) target = $region12
      $region11: #{tpu_custom_call.1} parent=5 // pred_region
        %s406 = ssub.s32 %s25, 1
        // Predicated region
        $region13: #{tpu_custom_call.1} parent=11 // pred_check
          %p407 = pneg %p72
        $region14: #{tpu_custom_call.1} parent=11 // pred_check_branch
          %409 = sbr.rel (%p407) target = $region16
        $region15: #{tpu_custom_call.1} parent=11 // pred_region
          _
        $region16: #{tpu_custom_call.1} parent=11 // pred_fallthru
          _
        // Predicated region
        $region17: #{tpu_custom_call.1} parent=11 // pred_check
          %p410 = pneg %p93
        $region18: #{tpu_custom_call.1} parent=11 // pred_check_branch
          %412 = sbr.rel (%p410) target = $region20
        $region19: #{tpu_custom_call.1} parent=11 // pred_region
          _
        $region20: #{tpu_custom_call.1} parent=11 // pred_fallthru
          _
        // Predicated region
        $region21: #{tpu_custom_call.1} parent=11 // pred_check
          %p413 = pneg %p114
        $region22: #{tpu_custom_call.1} parent=11 // pred_check_branch
          %415 = sbr.rel (%p413) target = $region24
        $region23: #{tpu_custom_call.1} parent=11 // pred_region
          _
        $region24: #{tpu_custom_call.1} parent=11 // pred_fallthru
          _
        // Predicated region
        $region25: #{tpu_custom_call.1} parent=11 // pred_check
          %p416 = pneg %p135
        $region26: #{tpu_custom_call.1} parent=11 // pred_check_branch
          %418 = sbr.rel (%p416) target = $region28
        $region27: #{tpu_custom_call.1} parent=11 // pred_region
          _
        $region28: #{tpu_custom_call.1} parent=11 // pred_fallthru
          _
        // Predicated region
        $region29: #{tpu_custom_call.1} parent=11 // pred_check
          %p419 = pneg %p156
        $region30: #{tpu_custom_call.1} parent=11 // pred_check_branch
          %421 = sbr.rel (%p419) target = $region32
        $region31: #{tpu_custom_call.1} parent=11 // pred_region
          _
        $region32: #{tpu_custom_call.1} parent=11 // pred_fallthru
          _
        // Predicated region
        $region33: #{tpu_custom_call.1} parent=11 // pred_check
          %p422 = pneg %p177
        $region34: #{tpu_custom_call.1} parent=11 // pred_check_branch
          %424 = sbr.rel (%p422) target = $region36
        $region35: #{tpu_custom_call.1} parent=11 // pred_region
          _
        $region36: #{tpu_custom_call.1} parent=11 // pred_fallthru
          _
        // Predicated region
        $region37: #{tpu_custom_call.1} parent=11 // pred_check
          %p425 = pneg %p198
        $region38: #{tpu_custom_call.1} parent=11 // pred_check_branch
          %427 = sbr.rel (%p425) target = $region40
        $region39: #{tpu_custom_call.1} parent=11 // pred_region
          _
        $region40: #{tpu_custom_call.1} parent=11 // pred_fallthru
          _
        // Predicated region
        $region41: #{tpu_custom_call.1} parent=11 // pred_check
          %p428 = pneg %p219
        $region42: #{tpu_custom_call.1} parent=11 // pred_check_branch
          %430 = sbr.rel (%p428) target = $region44
        $region43: #{tpu_custom_call.1} parent=11 // pred_region
          _
        $region44: #{tpu_custom_call.1} parent=11 // pred_fallthru
          _
        // Predicated region
        $region45: #{tpu_custom_call.1} parent=11 // pred_check
          %p431 = pneg %p240
        $region46: #{tpu_custom_call.1} parent=11 // pred_check_branch
          %433 = sbr.rel (%p431) target = $region48
        $region47: #{tpu_custom_call.1} parent=11 // pred_region
          _
        $region48: #{tpu_custom_call.1} parent=11 // pred_fallthru
          _
        // Predicated region
        $region49: #{tpu_custom_call.1} parent=11 // pred_check
          %p434 = pneg %p261
        $region50: #{tpu_custom_call.1} parent=11 // pred_check_branch
          %436 = sbr.rel (%p434) target = $region52
        $region51: #{tpu_custom_call.1} parent=11 // pred_region
          _
        $region52: #{tpu_custom_call.1} parent=11 // pred_fallthru
          _
        // Predicated region
        $region53: #{tpu_custom_call.1} parent=11 // pred_check
          %p437 = pneg %p282
        $region54: #{tpu_custom_call.1} parent=11 // pred_check_branch
          %439 = sbr.rel (%p437) target = $region56
        $region55: #{tpu_custom_call.1} parent=11 // pred_region
          _
        $region56: #{tpu_custom_call.1} parent=11 // pred_fallthru
          _
        // Predicated region
        $region57: #{tpu_custom_call.1} parent=11 // pred_check
          %p440 = pneg %p303
        $region58: #{tpu_custom_call.1} parent=11 // pred_check_branch
          %442 = sbr.rel (%p440) target = $region60
        $region59: #{tpu_custom_call.1} parent=11 // pred_region
          _
        $region60: #{tpu_custom_call.1} parent=11 // pred_fallthru
          _
        // Predicated region
        $region61: #{tpu_custom_call.1} parent=11 // pred_check
          %p443 = pneg %p324
        $region62: #{tpu_custom_call.1} parent=11 // pred_check_branch
          %445 = sbr.rel (%p443) target = $region64
        $region63: #{tpu_custom_call.1} parent=11 // pred_region
          _
        $region64: #{tpu_custom_call.1} parent=11 // pred_fallthru
          _
        // Predicated region
        $region65: #{tpu_custom_call.1} parent=11 // pred_check
          %p446 = pneg %p345
        $region66: #{tpu_custom_call.1} parent=11 // pred_check_branch
          %448 = sbr.rel (%p446) target = $region68
        $region67: #{tpu_custom_call.1} parent=11 // pred_region
          _
        $region68: #{tpu_custom_call.1} parent=11 // pred_fallthru
          _
        // Predicated region
        $region69: #{tpu_custom_call.1} parent=11 // pred_check
          %p449 = pneg %p366
        $region70: #{tpu_custom_call.1} parent=11 // pred_check_branch
          %451 = sbr.rel (%p449) target = $region72
        $region71: #{tpu_custom_call.1} parent=11 // pred_region
          _
        $region72: #{tpu_custom_call.1} parent=11 // pred_fallthru
          _
      $region12: #{tpu_custom_call.1} parent=5 // pred_fallthru
        _
      %p452 = scmp.lt.s32.totalorder %s25, 2
      // Predicated region
      $region73: #{tpu_custom_call.1} parent=5 // pred_check
        %p453 = pneg %p452
      $region74: #{tpu_custom_call.1} parent=5 // pred_check_branch
        %455 = sbr.rel (%p453) target = $region76
      $region75: #{tpu_custom_call.1} parent=5 // pred_region
        // Predicated region
        $region77: #{tpu_custom_call.1} parent=75 // pred_check
          %p456 = pneg %p45
        $region78: #{tpu_custom_call.1} parent=75 // pred_check_branch
          %458 = sbr.rel (%p456) target = $region80
        $region79: #{tpu_custom_call.1} parent=75 // pred_region
          %p459 = scmp.lt.s32.totalorder %s25, 1
          %s460 = scalar_select %p459, %s25, 1
          %s461 = smul.addr %s460, 2
          %s462 = smul.addr %s461, 4
          %s463 = scalar_lea.vmem %s0, %s462
        $region80: #{tpu_custom_call.1} parent=75 // pred_fallthru
          _
      $region76: #{tpu_custom_call.1} parent=5 // pred_fallthru
        _
      %p464 = scmp.le.s32.totalorder 1, %s25
      %p465 = scmp.lt.s32.totalorder %s25, 3
      %p466 = pnand %p464, %p465
      %p467 = pneg %p466
      // Predicated region
      $region81: #{tpu_custom_call.1} parent=5 // pred_check
        _
      $region82: #{tpu_custom_call.1} parent=5 // pred_check_branch
        %469 = sbr.rel (%p466) target = $region84
      $region83: #{tpu_custom_call.1} parent=5 // pred_region
        %s470 = ssub.s32 %s25, 1
        %p471 = scmp.lt.s32.totalorder %s30, 1
        %s472 = scalar_select %p471, %s30, 1
        %s473 = smul.addr %s472, 2
        %s474 = smul.addr %s473, 4
        %s475 = scalar_lea.vmem %s0, %s474
        %p476 = pneg %p51
        %p477 = pneg %p48
        %p478 = pneg %p72
        %p479 = pneg %p69
        %p480 = pneg %p93
        %p481 = pneg %p90
        %p482 = pneg %p114
        %p483 = pneg %p111
        %p484 = pneg %p135
        %p485 = pneg %p132
        %p486 = pneg %p156
        %p487 = pneg %p153
        %p488 = pneg %p177
        %p489 = pneg %p174
        %p490 = pneg %p198
        %p491 = pneg %p195
        %p492 = pneg %p219
        %p493 = pneg %p216
        %p494 = pneg %p240
        %p495 = pneg %p237
        %p496 = pneg %p261
        %p497 = pneg %p258
        %p498 = pneg %p282
        %p499 = pneg %p279
        %p500 = pneg %p303
        %p501 = pneg %p300
        %p502 = pneg %p324
        %p503 = pneg %p321
        %p504 = pneg %p345
        %p505 = pneg %p342
        %p506 = pneg %p366
        %p507 = pneg %p363
        %p508 = pneg %p392
        %p509 = pneg %p389
        %s510 = sand.u32 %s379, 1
        %s511 = scalar_lea.sflag [#allocation3], %s510
        %s512 = sand.u32 %s379, 1
        %s513 = smul.addr %s512, 8
        %s514 = scalar_lea.vmem [#allocation2], %s513
        %p515 = scmp.lt.s32.totalorder %s30, 1
        %s516 = scalar_select %p515, %s30, 1
        %s517 = smul.addr %s516, 2
        %s518 = smul.addr %s517, 4
        %s519 = scalar_lea.vmem %s0, %s518
        %v521 = vld [vmem:[%s519] sm:$0xff]
        %v522 = vld [vmem:[%s2] sm:$0xf]
        %v523 = vld [vmem:[%s2 + $0x4] sm:$0xf]
        %v524 = vld [vmem:[%s2 + $0x8] sm:$0xf]
        %526 = vst [vmem:[#allocation1] ss:$2 sm:$0xff] %v521
        %v527 = vld.sshfl [vmem:[#allocation1] sm:$0xff pattern:$0x75316420]
        %v528 = vld.sshfl [vmem:[#allocation1 + $0x8] sm:$0xff pattern:$0x75316420]
        %v531 = vpack.c.bf16 %v527, %v527
        %v532 = vpack.c.bf16 %v528, %v528
        %v533 = vld [vmem:[%s3] sm:$0xff]
        %v534 = vld [vmem:[%s3 + $0x8] sm:$0xff]
        %v535 = vld [vmem:[%s3 + $0x10] sm:$0xff]
        %537 = vset.pattern.permute.xlu0 0
        %538 = vperm.xlu0 %537, %v533
        %v539 = vpop.permute.xlu0 %538
        %542 = vset.pattern.permute.xlu0 0
        %543 = vperm.xlu0 %542, %v534
        %v544 = vpop.permute.xlu0 %543
        %547 = vset.pattern.permute.xlu0 0
        %548 = vperm.xlu0 %547, %v535
        %v549 = vpop.permute.xlu0 %548
        %v554 = vunpack.c.l.b16 %v522
        %v555 = vunpack.c.l.b16 %v523
        %v556 = vunpack.c.l.b16 %v524
        %v557 = vpack.c.b16 %v555, %v554
        %v558 = vpack.c.b16 %v556, %v556
        %vm559 = vcmask 31744
        %v561 = vsel %vm559, %v557, 0
        %v564 = vsel %vm559, %v558, 0
        %vm566 = vcmask 1041408
        %v568 = vsel %vm566, %v531, 0
        %v571 = vsel %vm566, %v532, 0
        %573 = vmatpush.bf16.msra.mxu0 0
        %574 = vmatpush.bf16.msra.mxu0 0
        %575 = vmatpush.bf16.msra.mxu0 0
        %576 = vmatpush.bf16.msra.mxu0 0
        %577 = vmatpush.bf16.msra.mxu0 0
        %578 = vmatpush.bf16.msra.mxu0 0
        %579 = vmatpush.bf16.msra.mxu0 0
        %580 = vmatpush.bf16.msra.mxu0 %v568
        %581 = vmatmul.bf16.gmra.mxu0 %v561
        %v582 = vpop.f32.mrf.mxu0
        %v583 = vadd.f32 %v539, %v582
        %v584 = vpop.f32.mrf.mxu0
        %v585 = vadd.f32 %v544, %v584
        %586 = vmatmul.bf16.gmra.mxu0 %v564
        %v587 = vpop.f32.mrf.mxu0
        %v588 = vadd.f32 %v549, %v587
        %v589 = vpop.f32.mrf.mxu0
        %590 = vdwg.mxu0
        %591 = vmatpush.bf16.msra.mxu0 0
        %592 = vmatpush.bf16.msra.mxu0 0
        %593 = vmatpush.bf16.msra.mxu0 0
        %594 = vmatpush.bf16.msra.mxu0 0
        %595 = vmatpush.bf16.msra.mxu0 0
        %596 = vmatpush.bf16.msra.mxu0 0
        %597 = vmatpush.bf16.msra.mxu0 0
        %598 = vmatpush.bf16.msra.mxu0 %v571
        %599 = vmatmul.bf16.gmra.mxu0 %v561
        %v600 = vpop.f32.mrf.mxu0
        %v601 = vadd.f32 %v539, %v600
        %v602 = vpop.f32.mrf.mxu0
        %v603 = vadd.f32 %v544, %v602
        %604 = vmatmul.bf16.gmra.mxu0 %v564
        %v605 = vpop.f32.mrf.mxu0
        %v606 = vadd.f32 %v549, %v605
        %v607 = vpop.f32.mrf.mxu0
        %608 = vdwg.mxu0
        %v609 = vxor.u32 %v583, 2147483648
        %v610 = vxor.u32 %v601, 2147483648
        %v611 = vxor.u32 %v585, 2147483648
        %v612 = vxor.u32 %v603, 2147483648
        %v613 = vxor.u32 %v588, 2147483648
        %v614 = vxor.u32 %v606, 2147483648
        %v615 = vmul.f32 %v609, 1.442695
        %v616 = vpow.pop %v615
        %v617 = vmul.f32 %v610, 1.442695
        %v618 = vpow.pop %v617
        %v619 = vmul.f32 %v611, 1.442695
        %v620 = vpow.pop %v619
        %v621 = vmul.f32 %v612, 1.442695
        %v622 = vpow.pop %v621
        %v623 = vmul.f32 %v613, 1.442695
        %v624 = vpow.pop %v623
        %v625 = vmul.f32 %v614, 1.442695
        %v626 = vpow.pop %v625
        %v627 = vadd.f32 %v616, 1.0
        %v628 = vadd.f32 %v618, 1.0
        %v629 = vadd.f32 %v620, 1.0
        %v630 = vadd.f32 %v622, 1.0
        %v631 = vadd.f32 %v624, 1.0
        %v632 = vadd.f32 %v626, 1.0
        %v633 = vrcp.pop %v627
        %v634 = vmul.f32 %v627, %v633
        %v635 = vsub.f32 1.0, %v634
        %v636 = vmul.f32 %v633, %v635
        %v637 = vadd.f32 %v633, %v636
        %vm638 = vweird.f32 %v627
        %vm639 = vweird.f32 %v633
        %vm640 = vmor %vm638, %vm639
        %v641 = vsel %vm640, %v633, %v637
        %v642 = vand.u32 2147483647, %v627
        %vm643 = vcmp.eq.f32.partialorder %v642, 8.507059e+37
        %v644 = vand.u32 %v627, 2147483648
        %v645 = vor.u32 1.1754944e-38, %v644
        %v646 = vsel %vm643, %v645, %v641
        %v647 = vmul.f32 1.0, %v646
        %v648 = vrcp.pop %v628
        %v649 = vmul.f32 %v628, %v648
        %v650 = vsub.f32 1.0, %v649
        %v651 = vmul.f32 %v648, %v650
        %v652 = vadd.f32 %v648, %v651
        %vm653 = vweird.f32 %v628
        %vm654 = vweird.f32 %v648
        %vm655 = vmor %vm653, %vm654
        %v656 = vsel %vm655, %v648, %v652
        %v657 = vand.u32 2147483647, %v628
        %vm658 = vcmp.eq.f32.partialorder %v657, 8.507059e+37
        %v659 = vand.u32 %v628, 2147483648
        %v660 = vor.u32 1.1754944e-38, %v659
        %v661 = vsel %vm658, %v660, %v656
        %v662 = vmul.f32 1.0, %v661
        %v663 = vrcp.pop %v629
        %v664 = vmul.f32 %v629, %v663
        %v665 = vsub.f32 1.0, %v664
        %v666 = vmul.f32 %v663, %v665
        %v667 = vadd.f32 %v663, %v666
        %vm668 = vweird.f32 %v629
        %vm669 = vweird.f32 %v663
        %vm670 = vmor %vm668, %vm669
        %v671 = vsel %vm670, %v663, %v667
        %v672 = vand.u32 2147483647, %v629
        %vm673 = vcmp.eq.f32.partialorder %v672, 8.507059e+37
        %v674 = vand.u32 %v629, 2147483648
        %v675 = vor.u32 1.1754944e-38, %v674
        %v676 = vsel %vm673, %v675, %v671
        %v677 = vmul.f32 1.0, %v676
        %v678 = vrcp.pop %v630
        %v679 = vmul.f32 %v630, %v678
        %v680 = vsub.f32 1.0, %v679
        %v681 = vmul.f32 %v678, %v680
        %v682 = vadd.f32 %v678, %v681
        %vm683 = vweird.f32 %v630
        %vm684 = vweird.f32 %v678
        %vm685 = vmor %vm683, %vm684
        %v686 = vsel %vm685, %v678, %v682
        %v687 = vand.u32 2147483647, %v630
        %vm688 = vcmp.eq.f32.partialorder %v687, 8.507059e+37
        %v689 = vand.u32 %v630, 2147483648
        %v690 = vor.u32 1.1754944e-38, %v689
        %v691 = vsel %vm688, %v690, %v686
        %v692 = vmul.f32 1.0, %v691
        %v693 = vrcp.pop %v631
        %v694 = vmul.f32 %v631, %v693
        %v695 = vsub.f32 1.0, %v694
        %v696 = vmul.f32 %v693, %v695
        %v697 = vadd.f32 %v693, %v696
        %vm698 = vweird.f32 %v631
        %vm699 = vweird.f32 %v693
        %vm700 = vmor %vm698, %vm699
        %v701 = vsel %vm700, %v693, %v697
        %v702 = vand.u32 2147483647, %v631
        %vm703 = vcmp.eq.f32.partialorder %v702, 8.507059e+37
        %v704 = vand.u32 %v631, 2147483648
        %v705 = vor.u32 1.1754944e-38, %v704
        %v706 = vsel %vm703, %v705, %v701
        %v707 = vmul.f32 1.0, %v706
        %v708 = vrcp.pop %v632
        %v709 = vmul.f32 %v632, %v708
        %v710 = vsub.f32 1.0, %v709
        %v711 = vmul.f32 %v708, %v710
        %v712 = vadd.f32 %v708, %v711
        %vm713 = vweird.f32 %v632
        %vm714 = vweird.f32 %v708
        %vm715 = vmor %vm713, %vm714
        %v716 = vsel %vm715, %v708, %v712
        %v717 = vand.u32 2147483647, %v632
        %vm718 = vcmp.eq.f32.partialorder %v717, 8.507059e+37
        %v719 = vand.u32 %v632, 2147483648
        %v720 = vor.u32 1.1754944e-38, %v719
        %v721 = vsel %vm718, %v720, %v716
        %v722 = vmul.f32 1.0, %v721
        %v723 = vadd.f32 %v583, %v647
        %v724 = vadd.f32 %v601, %v662
        %v725 = vadd.f32 %v585, %v677
        %v726 = vadd.f32 %v603, %v692
        %v727 = vadd.f32 %v588, %v707
        %v728 = vadd.f32 %v606, %v722
        %v729 = vld [vmem:[%s4] sm:$0xff]
        %v730 = vld [vmem:[%s4 + $0x8] sm:$0xff]
        %v731 = vld [vmem:[%s4 + $0x10] sm:$0xff]
        %v732 = vld [vmem:[%s1] sm:$0x3]
        %v733 = vld [vmem:[%s1 + $0x2] sm:$0x3]
        %v734 = vld [vmem:[%s1 + $0x4] sm:$0x3]
        %v735 = vld [vmem:[%s1 + $0x6] sm:$0x3]
        %v736 = vld [vmem:[%s1 + $0x8] sm:$0x3]
        %v737 = vld [vmem:[%s1 + $0xa] sm:$0x3]
        %v738 = vld [vmem:[%s1 + $0xc] sm:$0x3]
        %v739 = vld [vmem:[%s1 + $0xe] sm:$0x3]
        %v740 = vld [vmem:[%s1 + $0x10] sm:$0x3]
        %741 = vrot.lane.b32.xlu0 %v723, 17
        %v742 = vpop.permute.xlu0 %741
        %743 = vrot.lane.b32.xlu0 %v725, 17
        %v744 = vpop.permute.xlu0 %743
        %745 = vrot.lane.b32.xlu0 %v727, 17
        %v746 = vpop.permute.xlu0 %745
        %747 = vrot.lane.b32.xlu0 %v724, 17
        %v748 = vpop.permute.xlu0 %747
        %749 = vrot.lane.b32.xlu0 %v726, 17
        %v750 = vpop.permute.xlu0 %749
        %751 = vrot.lane.b32.xlu0 %v728, 17
        %v752 = vpop.permute.xlu0 %751
        %v753 = vlaneseq
        %v754 = vand.u32 %v753, 127
        %vm755 = vcmp.lt.s32.totalorder %v754, 17
        %v756 = vsel %vm755, %v742, %v748
        %v757 = vsel %vm755, %v744, %v750
        %v758 = vsel %vm755, %v746, %v752
        %v759 = vsel %vm755, %v748, %v742
        %v760 = vsel %vm755, %v750, %v744
        %v761 = vsel %vm755, %v752, %v746
        %v763 = vperm.slane %v732, 0
        %v764 = vperm.slane %v732, 1
        %768 = vset.pattern.permute.xlu0 0
        %769 = vperm.xlu0 %768, %v729
        %v770 = vpop.permute.xlu0 %769
        %773 = vset.pattern.permute.xlu0 0
        %774 = vperm.xlu0 %773, %v730
        %v775 = vpop.permute.xlu0 %774
        %778 = vset.pattern.permute.xlu0 0
        %779 = vperm.xlu0 %778, %v731
        %v780 = vpop.permute.xlu0 %779
        %v782 = vmul.f32 %v763, %v770
        %v783 = vmul.f32 %v764, %v770
        %v784 = vmul.f32 %v763, %v775
        %v785 = vmul.f32 %v764, %v775
        %v786 = vmul.f32 %v763, %v780
        %v787 = vmul.f32 %v764, %v780
        %v788 = vmul.f32 %v759, %v782
        %v789 = vmul.f32 %v756, %v783
        %v790 = vmul.f32 %v760, %v784
        %v791 = vmul.f32 %v757, %v785
        %v792 = vmul.f32 %v761, %v786
        %v793 = vmul.f32 %v758, %v787
        %794 = vrot.lane.b32.xlu0 %v723, 16
        %v795 = vpop.permute.xlu0 %794
        %796 = vrot.lane.b32.xlu0 %v725, 16
        %v797 = vpop.permute.xlu0 %796
        %798 = vrot.lane.b32.xlu0 %v727, 16
        %v799 = vpop.permute.xlu0 %798
        %800 = vrot.lane.b32.xlu0 %v724, 16
        %v801 = vpop.permute.xlu0 %800
        %802 = vrot.lane.b32.xlu0 %v726, 16
        %v803 = vpop.permute.xlu0 %802
        %804 = vrot.lane.b32.xlu0 %v728, 16
        %v805 = vpop.permute.xlu0 %804
        %vm806 = vcmp.lt.s32.totalorder %v754, 16
        %v807 = vsel %vm806, %v795, %v801
        %v808 = vsel %vm806, %v797, %v803
        %v809 = vsel %vm806, %v799, %v805
        %v810 = vsel %vm806, %v801, %v795
        %v811 = vsel %vm806, %v803, %v797
        %v812 = vsel %vm806, %v805, %v799
        %v814 = vperm.slane %v733, 0
        %v815 = vperm.slane %v733, 1
        %818 = vset.pattern.permute.xlu0 1
        %819 = vperm.xlu0 %818, %v729
        %v820 = vpop.permute.xlu0 %819
        %822 = vset.pattern.permute.xlu0 1
        %823 = vperm.xlu0 %822, %v730
        %v824 = vpop.permute.xlu0 %823
        %826 = vset.pattern.permute.xlu0 1
        %827 = vperm.xlu0 %826, %v731
        %v828 = vpop.permute.xlu0 %827
        %v830 = vmul.f32 %v814, %v820
        %v831 = vmul.f32 %v815, %v820
        %v832 = vmul.f32 %v814, %v824
        %v833 = vmul.f32 %v815, %v824
        %v834 = vmul.f32 %v814, %v828
        %v835 = vmul.f32 %v815, %v828
        %v836 = vmul.f32 %v810, %v830
        %v837 = vmul.f32 %v807, %v831
        %v838 = vmul.f32 %v811, %v832
        %v839 = vmul.f32 %v808, %v833
        %v840 = vmul.f32 %v812, %v834
        %v841 = vmul.f32 %v809, %v835
        %v842 = vadd.f32 %v788, %v836
        %v843 = vadd.f32 %v789, %v837
        %v844 = vadd.f32 %v790, %v838
        %v845 = vadd.f32 %v791, %v839
        %v846 = vadd.f32 %v792, %v840
        %v847 = vadd.f32 %v793, %v841
        %848 = vrot.lane.b32.xlu0 %v723, 15
        %v849 = vpop.permute.xlu0 %848
        %850 = vrot.lane.b32.xlu0 %v725, 15
        %v851 = vpop.permute.xlu0 %850
        %852 = vrot.lane.b32.xlu0 %v727, 15
        %v853 = vpop.permute.xlu0 %852
        %854 = vrot.lane.b32.xlu0 %v724, 15
        %v855 = vpop.permute.xlu0 %854
        %856 = vrot.lane.b32.xlu0 %v726, 15
        %v857 = vpop.permute.xlu0 %856
        %858 = vrot.lane.b32.xlu0 %v728, 15
        %v859 = vpop.permute.xlu0 %858
        %vm860 = vcmp.lt.s32.totalorder %v754, 15
        %v861 = vsel %vm860, %v849, %v855
        %v862 = vsel %vm860, %v851, %v857
        %v863 = vsel %vm860, %v853, %v859
        %v864 = vsel %vm860, %v855, %v849
        %v865 = vsel %vm860, %v857, %v851
        %v866 = vsel %vm860, %v859, %v853
        %v868 = vperm.slane %v734, 0
        %v869 = vperm.slane %v734, 1
        %872 = vset.pattern.permute.xlu0 2
        %873 = vperm.xlu0 %872, %v729
        %v874 = vpop.permute.xlu0 %873
        %876 = vset.pattern.permute.xlu0 2
        %877 = vperm.xlu0 %876, %v730
        %v878 = vpop.permute.xlu0 %877
        %880 = vset.pattern.permute.xlu0 2
        %881 = vperm.xlu0 %880, %v731
        %v882 = vpop.permute.xlu0 %881
        %v884 = vmul.f32 %v868, %v874
        %v885 = vmul.f32 %v869, %v874
        %v886 = vmul.f32 %v868, %v878
        %v887 = vmul.f32 %v869, %v878
        %v888 = vmul.f32 %v868, %v882
        %v889 = vmul.f32 %v869, %v882
        %v890 = vmul.f32 %v864, %v884
        %v891 = vmul.f32 %v861, %v885
        %v892 = vmul.f32 %v865, %v886
        %v893 = vmul.f32 %v862, %v887
        %v894 = vmul.f32 %v866, %v888
        %v895 = vmul.f32 %v863, %v889
        %v896 = vadd.f32 %v842, %v890
        %v897 = vadd.f32 %v843, %v891
        %v898 = vadd.f32 %v844, %v892
        %v899 = vadd.f32 %v845, %v893
        %v900 = vadd.f32 %v846, %v894
        %v901 = vadd.f32 %v847, %v895
        %902 = vrot.lane.b32.xlu0 %v723, 1
        %v903 = vpop.permute.xlu0 %902
        %904 = vrot.lane.b32.xlu0 %v725, 1
        %v905 = vpop.permute.xlu0 %904
        %906 = vrot.lane.b32.xlu0 %v727, 1
        %v907 = vpop.permute.xlu0 %906
        %908 = vrot.lane.b32.xlu0 %v724, 1
        %v909 = vpop.permute.xlu0 %908
        %910 = vrot.lane.b32.xlu0 %v726, 1
        %v911 = vpop.permute.xlu0 %910
        %912 = vrot.lane.b32.xlu0 %v728, 1
        %v913 = vpop.permute.xlu0 %912
        %vm914 = vcmp.lt.s32.totalorder %v754, 1
        %v915 = vsel %vm914, %v903, %v909
        %v916 = vsel %vm914, %v905, %v911
        %v917 = vsel %vm914, %v907, %v913
        %v918 = vsel %vm914, %v909, %v903
        %v919 = vsel %vm914, %v911, %v905
        %v920 = vsel %vm914, %v913, %v907
        %v922 = vperm.slane %v735, 0
        %v923 = vperm.slane %v735, 1
        %926 = vset.pattern.permute.xlu0 3
        %927 = vperm.xlu0 %926, %v729
        %v928 = vpop.permute.xlu0 %927
        %930 = vset.pattern.permute.xlu0 3
        %931 = vperm.xlu0 %930, %v730
        %v932 = vpop.permute.xlu0 %931
        %934 = vset.pattern.permute.xlu0 3
        %935 = vperm.xlu0 %934, %v731
        %v936 = vpop.permute.xlu0 %935
        %v938 = vmul.f32 %v922, %v928
        %v939 = vmul.f32 %v923, %v928
        %v940 = vmul.f32 %v922, %v932
        %v941 = vmul.f32 %v923, %v932
        %v942 = vmul.f32 %v922, %v936
        %v943 = vmul.f32 %v923, %v936
        %v944 = vmul.f32 %v918, %v938
        %v945 = vmul.f32 %v915, %v939
        %v946 = vmul.f32 %v919, %v940
        %v947 = vmul.f32 %v916, %v941
        %v948 = vmul.f32 %v920, %v942
        %v949 = vmul.f32 %v917, %v943
        %v950 = vadd.f32 %v896, %v944
        %v951 = vadd.f32 %v897, %v945
        %v952 = vadd.f32 %v898, %v946
        %v953 = vadd.f32 %v899, %v947
        %v954 = vadd.f32 %v900, %v948
        %v955 = vadd.f32 %v901, %v949
        %v957 = vperm.slane %v736, 0
        %v958 = vperm.slane %v736, 1
        %961 = vset.pattern.permute.xlu0 4
        %962 = vperm.xlu0 %961, %v729
        %v963 = vpop.permute.xlu0 %962
        %965 = vset.pattern.permute.xlu0 4
        %966 = vperm.xlu0 %965, %v730
        %v967 = vpop.permute.xlu0 %966
        %969 = vset.pattern.permute.xlu0 4
        %970 = vperm.xlu0 %969, %v731
        %v971 = vpop.permute.xlu0 %970
        %v973 = vmul.f32 %v957, %v963
        %v974 = vmul.f32 %v958, %v963
        %v975 = vmul.f32 %v957, %v967
        %v976 = vmul.f32 %v958, %v967
        %v977 = vmul.f32 %v957, %v971
        %v978 = vmul.f32 %v958, %v971
        %v979 = vmul.f32 %v723, %v973
        %v980 = vmul.f32 %v724, %v974
        %v981 = vmul.f32 %v725, %v975
        %v982 = vmul.f32 %v726, %v976
        %v983 = vmul.f32 %v727, %v977
        %v984 = vmul.f32 %v728, %v978
        %v985 = vadd.f32 %v950, %v979
        %v986 = vadd.f32 %v951, %v980
        %v987 = vadd.f32 %v952, %v981
        %v988 = vadd.f32 %v953, %v982
        %v989 = vadd.f32 %v954, %v983
        %v990 = vadd.f32 %v955, %v984
        %991 = vrot.lane.b32.xlu0 %v723, 127
        %v992 = vpop.permute.xlu0 %991
        %993 = vrot.lane.b32.xlu0 %v725, 127
        %v994 = vpop.permute.xlu0 %993
        %995 = vrot.lane.b32.xlu0 %v727, 127
        %v996 = vpop.permute.xlu0 %995
        %997 = vrot.lane.b32.xlu0 %v724, 127
        %v998 = vpop.permute.xlu0 %997
        %999 = vrot.lane.b32.xlu0 %v726, 127
        %v1000 = vpop.permute.xlu0 %999
        %1001 = vrot.lane.b32.xlu0 %v728, 127
        %v1002 = vpop.permute.xlu0 %1001
        %vm1003 = vcmp.lt.s32.totalorder %v754, 127
        %v1004 = vsel %vm1003, %v992, %v998
        %v1005 = vsel %vm1003, %v994, %v1000
        %v1006 = vsel %vm1003, %v996, %v1002
        %v1007 = vsel %vm1003, %v998, %v992
        %v1008 = vsel %vm1003, %v1000, %v994
        %v1009 = vsel %vm1003, %v1002, %v996
        %v1011 = vperm.slane %v737, 0
        %v1012 = vperm.slane %v737, 1
        %1015 = vset.pattern.permute.xlu0 5
        %1016 = vperm.xlu0 %1015, %v729
        %v1017 = vpop.permute.xlu0 %1016
        %1019 = vset.pattern.permute.xlu0 5
        %1020 = vperm.xlu0 %1019, %v730
        %v1021 = vpop.permute.xlu0 %1020
        %1023 = vset.pattern.permute.xlu0 5
        %1024 = vperm.xlu0 %1023, %v731
        %v1025 = vpop.permute.xlu0 %1024
        %v1027 = vmul.f32 %v1011, %v1017
        %v1028 = vmul.f32 %v1012, %v1017
        %v1029 = vmul.f32 %v1011, %v1021
        %v1030 = vmul.f32 %v1012, %v1021
        %v1031 = vmul.f32 %v1011, %v1025
        %v1032 = vmul.f32 %v1012, %v1025
        %v1033 = vmul.f32 %v1004, %v1027
        %v1034 = vmul.f32 %v1007, %v1028
        %v1035 = vmul.f32 %v1005, %v1029
        %v1036 = vmul.f32 %v1008, %v1030
        %v1037 = vmul.f32 %v1006, %v1031
        %v1038 = vmul.f32 %v1009, %v1032
        %v1039 = vadd.f32 %v985, %v1033
        %v1040 = vadd.f32 %v986, %v1034
        %v1041 = vadd.f32 %v987, %v1035
        %v1042 = vadd.f32 %v988, %v1036
        %v1043 = vadd.f32 %v989, %v1037
        %v1044 = vadd.f32 %v990, %v1038
        %1045 = vrot.lane.b32.xlu0 %v723, 113
        %v1046 = vpop.permute.xlu0 %1045
        %1047 = vrot.lane.b32.xlu0 %v725, 113
        %v1048 = vpop.permute.xlu0 %1047
        %1049 = vrot.lane.b32.xlu0 %v727, 113
        %v1050 = vpop.permute.xlu0 %1049
        %1051 = vrot.lane.b32.xlu0 %v724, 113
        %v1052 = vpop.permute.xlu0 %1051
        %1053 = vrot.lane.b32.xlu0 %v726, 113
        %v1054 = vpop.permute.xlu0 %1053
        %1055 = vrot.lane.b32.xlu0 %v728, 113
        %v1056 = vpop.permute.xlu0 %1055
        %vm1057 = vcmp.lt.s32.totalorder %v754, 113
        %v1058 = vsel %vm1057, %v1046, %v1052
        %v1059 = vsel %vm1057, %v1048, %v1054
        %v1060 = vsel %vm1057, %v1050, %v1056
        %v1061 = vsel %vm1057, %v1052, %v1046
        %v1062 = vsel %vm1057, %v1054, %v1048
        %v1063 = vsel %vm1057, %v1056, %v1050
        %v1065 = vperm.slane %v738, 0
        %v1066 = vperm.slane %v738, 1
        %1069 = vset.pattern.permute.xlu0 6
        %1070 = vperm.xlu0 %1069, %v729
        %v1071 = vpop.permute.xlu0 %1070
        %1073 = vset.pattern.permute.xlu0 6
        %1074 = vperm.xlu0 %1073, %v730
        %v1075 = vpop.permute.xlu0 %1074
        %1077 = vset.pattern.permute.xlu0 6
        %1078 = vperm.xlu0 %1077, %v731
        %v1079 = vpop.permute.xlu0 %1078
        %v1081 = vmul.f32 %v1065, %v1071
        %v1082 = vmul.f32 %v1066, %v1071
        %v1083 = vmul.f32 %v1065, %v1075
        %v1084 = vmul.f32 %v1066, %v1075
        %v1085 = vmul.f32 %v1065, %v1079
        %v1086 = vmul.f32 %v1066, %v1079
        %v1087 = vmul.f32 %v1058, %v1081
        %v1088 = vmul.f32 %v1061, %v1082
        %v1089 = vmul.f32 %v1059, %v1083
        %v1090 = vmul.f32 %v1062, %v1084
        %v1091 = vmul.f32 %v1060, %v1085
        %v1092 = vmul.f32 %v1063, %v1086
        %v1093 = vadd.f32 %v1039, %v1087
        %v1094 = vadd.f32 %v1040, %v1088
        %v1095 = vadd.f32 %v1041, %v1089
        %v1096 = vadd.f32 %v1042, %v1090
        %v1097 = vadd.f32 %v1043, %v1091
        %v1098 = vadd.f32 %v1044, %v1092
        %1099 = vrot.lane.b32.xlu0 %v723, 112
        %v1100 = vpop.permute.xlu0 %1099
        %1101 = vrot.lane.b32.xlu0 %v725, 112
        %v1102 = vpop.permute.xlu0 %1101
        %1103 = vrot.lane.b32.xlu0 %v727, 112
        %v1104 = vpop.permute.xlu0 %1103
        %1105 = vrot.lane.b32.xlu0 %v724, 112
        %v1106 = vpop.permute.xlu0 %1105
        %1107 = vrot.lane.b32.xlu0 %v726, 112
        %v1108 = vpop.permute.xlu0 %1107
        %1109 = vrot.lane.b32.xlu0 %v728, 112
        %v1110 = vpop.permute.xlu0 %1109
        %vm1111 = vcmp.lt.s32.totalorder %v754, 112
        %v1112 = vsel %vm1111, %v1100, %v1106
        %v1113 = vsel %vm1111, %v1102, %v1108
        %v1114 = vsel %vm1111, %v1104, %v1110
        %v1115 = vsel %vm1111, %v1106, %v1100
        %v1116 = vsel %vm1111, %v1108, %v1102
        %v1117 = vsel %vm1111, %v1110, %v1104
        %v1119 = vperm.slane %v739, 0
        %v1120 = vperm.slane %v739, 1
        %1123 = vset.pattern.permute.xlu0 7
        %1124 = vperm.xlu0 %1123, %v729
        %v1125 = vpop.permute.xlu0 %1124
        %1127 = vset.pattern.permute.xlu0 7
        %1128 = vperm.xlu0 %1127, %v730
        %v1129 = vpop.permute.xlu0 %1128
        %1131 = vset.pattern.permute.xlu0 7
        %1132 = vperm.xlu0 %1131, %v731
        %v1133 = vpop.permute.xlu0 %1132
        %v1135 = vmul.f32 %v1119, %v1125
        %v1136 = vmul.f32 %v1120, %v1125
        %v1137 = vmul.f32 %v1119, %v1129
        %v1138 = vmul.f32 %v1120, %v1129
        %v1139 = vmul.f32 %v1119, %v1133
        %v1140 = vmul.f32 %v1120, %v1133
        %v1141 = vmul.f32 %v1112, %v1135
        %v1142 = vmul.f32 %v1115, %v1136
        %v1143 = vmul.f32 %v1113, %v1137
        %v1144 = vmul.f32 %v1116, %v1138
        %v1145 = vmul.f32 %v1114, %v1139
        %v1146 = vmul.f32 %v1117, %v1140
        %v1147 = vadd.f32 %v1093, %v1141
        %v1148 = vadd.f32 %v1094, %v1142
        %v1149 = vadd.f32 %v1095, %v1143
        %v1150 = vadd.f32 %v1096, %v1144
        %v1151 = vadd.f32 %v1097, %v1145
        %v1152 = vadd.f32 %v1098, %v1146
        %1153 = vrot.lane.b32.xlu0 %v723, 111
        %v1154 = vpop.permute.xlu0 %1153
        %1155 = vrot.lane.b32.xlu0 %v725, 111
        %v1156 = vpop.permute.xlu0 %1155
        %1157 = vrot.lane.b32.xlu0 %v727, 111
        %v1158 = vpop.permute.xlu0 %1157
        %1159 = vrot.lane.b32.xlu0 %v724, 111
        %v1160 = vpop.permute.xlu0 %1159
        %1161 = vrot.lane.b32.xlu0 %v726, 111
        %v1162 = vpop.permute.xlu0 %1161
        %1163 = vrot.lane.b32.xlu0 %v728, 111
        %v1164 = vpop.permute.xlu0 %1163
        %vm1165 = vcmp.lt.s32.totalorder %v754, 111
        %v1166 = vsel %vm1165, %v1154, %v1160
        %v1167 = vsel %vm1165, %v1156, %v1162
        %v1168 = vsel %vm1165, %v1158, %v1164
        %v1169 = vsel %vm1165, %v1160, %v1154
        %v1170 = vsel %vm1165, %v1162, %v1156
        %v1171 = vsel %vm1165, %v1164, %v1158
        %v1173 = vperm.slane %v740, 0
        %v1174 = vperm.slane %v740, 1
        %1177 = vset.pattern.permute.xlu0 8
        %1178 = vperm.xlu0 %1177, %v729
        %v1179 = vpop.permute.xlu0 %1178
        %1181 = vset.pattern.permute.xlu0 8
        %1182 = vperm.xlu0 %1181, %v730
        %v1183 = vpop.permute.xlu0 %1182
        %1185 = vset.pattern.permute.xlu0 8
        %1186 = vperm.xlu0 %1185, %v731
        %v1187 = vpop.permute.xlu0 %1186
        %v1189 = vmul.f32 %v1173, %v1179
        %v1190 = vmul.f32 %v1174, %v1179
        %v1191 = vmul.f32 %v1173, %v1183
        %v1192 = vmul.f32 %v1174, %v1183
        %v1193 = vmul.f32 %v1173, %v1187
        %v1194 = vmul.f32 %v1174, %v1187
        %v1195 = vmul.f32 %v1166, %v1189
        %v1196 = vmul.f32 %v1169, %v1190
        %v1197 = vmul.f32 %v1167, %v1191
        %v1198 = vmul.f32 %v1170, %v1192
        %v1199 = vmul.f32 %v1168, %v1193
        %v1200 = vmul.f32 %v1171, %v1194
        %v1201 = vadd.f32 %v1147, %v1195
        %v1202 = vadd.f32 %v1148, %v1196
        %v1203 = vadd.f32 %v1149, %v1197
        %v1204 = vadd.f32 %v1150, %v1198
        %v1205 = vadd.f32 %v1151, %v1199
        %v1206 = vadd.f32 %v1152, %v1200
        %v1207 = vld [vmem:[%s5] sm:$0xff]
        %v1208 = vld [vmem:[%s5 + $0x8] sm:$0xff]
        %v1209 = vld [vmem:[%s5 + $0x10] sm:$0xff]
        %1211 = vset.pattern.permute.xlu0 0
        %1212 = vperm.xlu0 %1211, %v1207
        %v1213 = vpop.permute.xlu0 %1212
        %1216 = vset.pattern.permute.xlu0 0
        %1217 = vperm.xlu0 %1216, %v1208
        %v1218 = vpop.permute.xlu0 %1217
        %1221 = vset.pattern.permute.xlu0 0
        %1222 = vperm.xlu0 %1221, %v1209
        %v1223 = vpop.permute.xlu0 %1222
        %v1225 = vadd.f32 %v1201, %v1213
        %v1226 = vadd.f32 %v1202, %v1213
        %v1227 = vadd.f32 %v1203, %v1218
        %v1228 = vadd.f32 %v1204, %v1218
        %v1229 = vadd.f32 %v1205, %v1223
        %v1230 = vadd.f32 %v1206, %v1223
        %v1231 = vmax.f32 %v1225, 0.0
        %v1232 = vmax.f32 %v1226, 0.0
        %v1233 = vmax.f32 %v1227, 0.0
        %v1234 = vmax.f32 %v1228, 0.0
        %v1235 = vmax.f32 %v1229, 0.0
        %v1236 = vmax.f32 %v1230, 0.0
        %v1237 = vld [vmem:[%s6] sm:$0xf]
        %v1238 = vld [vmem:[%s6 + $0x4] sm:$0xf]
        %v1239 = vld [vmem:[%s6 + $0x8] sm:$0xf]
        %v1240 = vpack.c.bf16 %v1233, %v1231
        %v1241 = vpack.c.bf16 %v1234, %v1232
        %v1242 = vpack.c.bf16 %v1235, %v1235
        %v1243 = vpack.c.bf16 %v1236, %v1236
        %v1244 = vld [vmem:[%s7] sm:$0xff]
        %v1245 = vld [vmem:[%s7 + $0x8] sm:$0xff]
        %v1246 = vld [vmem:[%s7 + $0x10] sm:$0xff]
        %1248 = vset.pattern.permute.xlu0 0
        %1249 = vperm.xlu0 %1248, %v1244
        %v1250 = vpop.permute.xlu0 %1249
        %1253 = vset.pattern.permute.xlu0 0
        %1254 = vperm.xlu0 %1253, %v1245
        %v1255 = vpop.permute.xlu0 %1254
        %1258 = vset.pattern.permute.xlu0 0
        %1259 = vperm.xlu0 %1258, %v1246
        %v1260 = vpop.permute.xlu0 %1259
        %v1265 = vunpack.c.l.b16 %v1237
        %v1266 = vunpack.c.l.b16 %v1238
        %v1267 = vunpack.c.l.b16 %v1239
        %v1268 = vpack.c.b16 %v1266, %v1265
        %v1269 = vpack.c.b16 %v1267, %v1267
        %vm1270 = vcmask 195584
        %v1272 = vsel %vm1270, %v1268, 0
        %v1275 = vsel %vm1270, %v1269, 0
        %vm1277 = vcmask 1043456
        %v1279 = vsel %vm1277, %v1242, 0
        %v1282 = vsel %vm1277, %v1243, 0
        %1284 = vmatpush.bf16.msra.mxu0 0
        %1285 = vmatpush.bf16.msra.mxu0 0
        %1286 = vmatpush.bf16.msra.mxu0 0
        %1287 = vmatpush.bf16.msra.mxu0 0
        %1288 = vmatpush.bf16.msra.mxu0 0
        %1289 = vmatpush.bf16.msra.mxu0 0
        %1290 = vmatpush.bf16.msra.mxu0 %v1279
        %1291 = vmatpush.bf16.msra.mxu0 %v1240
        %1292 = vmatmul.bf16.gmra.mxu0 %v1272
        %v1293 = vpop.f32.mrf.mxu0
        %v1294 = vadd.f32 %v1250, %v1293
        %v1295 = vpop.f32.mrf.mxu0
        %v1296 = vadd.f32 %v1255, %v1295
        %1297 = vmatmul.bf16.gmra.mxu0 %v1275
        %v1298 = vpop.f32.mrf.mxu0
        %v1299 = vadd.f32 %v1260, %v1298
        %v1300 = vpop.f32.mrf.mxu0
        %1301 = vdwg.mxu0
        %1302 = vmatpush.bf16.msra.mxu0 0
        %1303 = vmatpush.bf16.msra.mxu0 0
        %1304 = vmatpush.bf16.msra.mxu0 0
        %1305 = vmatpush.bf16.msra.mxu0 0
        %1306 = vmatpush.bf16.msra.mxu0 0
        %1307 = vmatpush.bf16.msra.mxu0 0
        %1308 = vmatpush.bf16.msra.mxu0 %v1282
        %1309 = vmatpush.bf16.msra.mxu0 %v1241
        %1310 = vmatmul.bf16.gmra.mxu0 %v1272
        %v1311 = vpop.f32.mrf.mxu0
        %v1312 = vadd.f32 %v1250, %v1311
        %v1313 = vpop.f32.mrf.mxu0
        %v1314 = vadd.f32 %v1255, %v1313
        %1315 = vmatmul.bf16.gmra.mxu0 %v1275
        %v1316 = vpop.f32.mrf.mxu0
        %v1317 = vadd.f32 %v1260, %v1316
        %v1318 = vpop.f32.mrf.mxu0
        %1319 = vdwg.mxu0
        %v1320 = vmax.f32 %v1294, 0.0
        %v1321 = vmax.f32 %v1312, 0.0
        %v1322 = vmax.f32 %v1296, 0.0
        %v1323 = vmax.f32 %v1314, 0.0
        %v1324 = vmax.f32 %v1299, 0.0
        %v1325 = vmax.f32 %v1317, 0.0
        %v1326 = vld [vmem:[%s8] sm:$0xff]
        %v1327 = vld [vmem:[%s8 + $0x8] sm:$0xff]
        %v1328 = vld [vmem:[%s8 + $0x10] sm:$0xff]
        %1330 = vset.pattern.permute.xlu0 0
        %1331 = vperm.xlu0 %1330, %v1326
        %v1332 = vpop.permute.xlu0 %1331
        %1335 = vset.pattern.permute.xlu0 0
        %1336 = vperm.xlu0 %1335, %v1327
        %v1337 = vpop.permute.xlu0 %1336
        %1340 = vset.pattern.permute.xlu0 0
        %1341 = vperm.xlu0 %1340, %v1328
        %v1342 = vpop.permute.xlu0 %1341
        %v1344 = vmul.f32 %v1320, %v1332
        %v1345 = vmul.f32 %v1321, %v1332
        %v1346 = vmul.f32 %v1322, %v1337
        %v1347 = vmul.f32 %v1323, %v1337
        %v1348 = vmul.f32 %v1324, %v1342
        %v1349 = vmul.f32 %v1325, %v1342
        %v1350 = vld [vmem:[%s9] sm:$0xff]
        %v1351 = vld [vmem:[%s9 + $0x8] sm:$0xff]
        %v1352 = vld [vmem:[%s9 + $0x10] sm:$0xff]
        %1354 = vset.pattern.permute.xlu0 0
        %1355 = vperm.xlu0 %1354, %v1350
        %v1356 = vpop.permute.xlu0 %1355
        %1359 = vset.pattern.permute.xlu0 0
        %1360 = vperm.xlu0 %1359, %v1351
        %v1361 = vpop.permute.xlu0 %1360
        %1364 = vset.pattern.permute.xlu0 0
        %1365 = vperm.xlu0 %1364, %v1352
        %v1366 = vpop.permute.xlu0 %1365
        %v1368 = vadd.f32 %v1344, %v1356
        %v1369 = vadd.f32 %v1345, %v1356
        %v1370 = vadd.f32 %v1346, %v1361
        %v1371 = vadd.f32 %v1347, %v1361
        %v1372 = vadd.f32 %v1348, %v1366
        %v1373 = vadd.f32 %v1349, %v1366
        %v1374 = vxor.u32 %v1368, 2147483648
        %v1375 = vxor.u32 %v1369, 2147483648
        %v1376 = vxor.u32 %v1370, 2147483648
        %v1377 = vxor.u32 %v1371, 2147483648
        %v1378 = vxor.u32 %v1372, 2147483648
        %v1379 = vxor.u32 %v1373, 2147483648
        %v1380 = vmul.f32 %v1374, 1.442695
        %v1381 = vpow.pop %v1380
        %v1382 = vmul.f32 %v1375, 1.442695
        %v1383 = vpow.pop %v1382
        %v1384 = vmul.f32 %v1376, 1.442695
        %v1385 = vpow.pop %v1384
        %v1386 = vmul.f32 %v1377, 1.442695
        %v1387 = vpow.pop %v1386
        %v1388 = vmul.f32 %v1378, 1.442695
        %v1389 = vpow.pop %v1388
        %v1390 = vmul.f32 %v1379, 1.442695
        %v1391 = vpow.pop %v1390
        %v1392 = vadd.f32 %v1381, 1.0
        %v1393 = vadd.f32 %v1383, 1.0
        %v1394 = vadd.f32 %v1385, 1.0
        %v1395 = vadd.f32 %v1387, 1.0
        %v1396 = vadd.f32 %v1389, 1.0
        %v1397 = vadd.f32 %v1391, 1.0
        %v1398 = vrcp.pop %v1392
        %v1399 = vmul.f32 %v1392, %v1398
        %v1400 = vsub.f32 1.0, %v1399
        %v1401 = vmul.f32 %v1398, %v1400
        %v1402 = vadd.f32 %v1398, %v1401
        %vm1403 = vweird.f32 %v1392
        %vm1404 = vweird.f32 %v1398
        %vm1405 = vmor %vm1403, %vm1404
        %v1406 = vsel %vm1405, %v1398, %v1402
        %v1407 = vand.u32 2147483647, %v1392
        %vm1408 = vcmp.eq.f32.partialorder %v1407, 8.507059e+37
        %v1409 = vand.u32 %v1392, 2147483648
        %v1410 = vor.u32 1.1754944e-38, %v1409
        %v1411 = vsel %vm1408, %v1410, %v1406
        %v1412 = vmul.f32 1.0, %v1411
        %v1413 = vrcp.pop %v1393
        %v1414 = vmul.f32 %v1393, %v1413
        %v1415 = vsub.f32 1.0, %v1414
        %v1416 = vmul.f32 %v1413, %v1415
        %v1417 = vadd.f32 %v1413, %v1416
        %vm1418 = vweird.f32 %v1393
        %vm1419 = vweird.f32 %v1413
        %vm1420 = vmor %vm1418, %vm1419
        %v1421 = vsel %vm1420, %v1413, %v1417
        %v1422 = vand.u32 2147483647, %v1393
        %vm1423 = vcmp.eq.f32.partialorder %v1422, 8.507059e+37
        %v1424 = vand.u32 %v1393, 2147483648
        %v1425 = vor.u32 1.1754944e-38, %v1424
        %v1426 = vsel %vm1423, %v1425, %v1421
        %v1427 = vmul.f32 1.0, %v1426
        %v1428 = vrcp.pop %v1394
        %v1429 = vmul.f32 %v1394, %v1428
        %v1430 = vsub.f32 1.0, %v1429
        %v1431 = vmul.f32 %v1428, %v1430
        %v1432 = vadd.f32 %v1428, %v1431
        %vm1433 = vweird.f32 %v1394
        %vm1434 = vweird.f32 %v1428
        %vm1435 = vmor %vm1433, %vm1434
        %v1436 = vsel %vm1435, %v1428, %v1432
        %v1437 = vand.u32 2147483647, %v1394
        %vm1438 = vcmp.eq.f32.partialorder %v1437, 8.507059e+37
        %v1439 = vand.u32 %v1394, 2147483648
        %v1440 = vor.u32 1.1754944e-38, %v1439
        %v1441 = vsel %vm1438, %v1440, %v1436
        %v1442 = vmul.f32 1.0, %v1441
        %v1443 = vrcp.pop %v1395
        %v1444 = vmul.f32 %v1395, %v1443
        %v1445 = vsub.f32 1.0, %v1444
        %v1446 = vmul.f32 %v1443, %v1445
        %v1447 = vadd.f32 %v1443, %v1446
        %vm1448 = vweird.f32 %v1395
        %vm1449 = vweird.f32 %v1443
        %vm1450 = vmor %vm1448, %vm1449
        %v1451 = vsel %vm1450, %v1443, %v1447
        %v1452 = vand.u32 2147483647, %v1395
        %vm1453 = vcmp.eq.f32.partialorder %v1452, 8.507059e+37
        %v1454 = vand.u32 %v1395, 2147483648
        %v1455 = vor.u32 1.1754944e-38, %v1454
        %v1456 = vsel %vm1453, %v1455, %v1451
        %v1457 = vmul.f32 1.0, %v1456
        %v1458 = vrcp.pop %v1396
        %v1459 = vmul.f32 %v1396, %v1458
        %v1460 = vsub.f32 1.0, %v1459
        %v1461 = vmul.f32 %v1458, %v1460
        %v1462 = vadd.f32 %v1458, %v1461
        %vm1463 = vweird.f32 %v1396
        %vm1464 = vweird.f32 %v1458
        %vm1465 = vmor %vm1463, %vm1464
        %v1466 = vsel %vm1465, %v1458, %v1462
        %v1467 = vand.u32 2147483647, %v1396
        %vm1468 = vcmp.eq.f32.partialorder %v1467, 8.507059e+37
        %v1469 = vand.u32 %v1396, 2147483648
        %v1470 = vor.u32 1.1754944e-38, %v1469
        %v1471 = vsel %vm1468, %v1470, %v1466
        %v1472 = vmul.f32 1.0, %v1471
        %v1473 = vrcp.pop %v1397
        %v1474 = vmul.f32 %v1397, %v1473
        %v1475 = vsub.f32 1.0, %v1474
        %v1476 = vmul.f32 %v1473, %v1475
        %v1477 = vadd.f32 %v1473, %v1476
        %vm1478 = vweird.f32 %v1397
        %vm1479 = vweird.f32 %v1473
        %vm1480 = vmor %vm1478, %vm1479
        %v1481 = vsel %vm1480, %v1473, %v1477
        %v1482 = vand.u32 2147483647, %v1397
        %vm1483 = vcmp.eq.f32.partialorder %v1482, 8.507059e+37
        %v1484 = vand.u32 %v1397, 2147483648
        %v1485 = vor.u32 1.1754944e-38, %v1484
        %v1486 = vsel %vm1483, %v1485, %v1481
        %v1487 = vmul.f32 1.0, %v1486
        %v1488 = vadd.f32 %v1368, %v1412
        %v1489 = vadd.f32 %v1369, %v1427
        %v1490 = vadd.f32 %v1370, %v1442
        %v1491 = vadd.f32 %v1371, %v1457
        %v1492 = vadd.f32 %v1372, %v1472
        %v1493 = vadd.f32 %v1373, %v1487
        %v1494 = vadd.f32 %v1488, %v1489
        %1495 = vadd.xlane.f32.xlu0 %v1494
        %v1496 = vpop.xlane.xlu0 %1495
        %v1497 = vadd.f32 %v1490, %v1491
        %1498 = vadd.xlane.f32.xlu0 %v1497
        %v1499 = vpop.xlane.xlu0 %1498
        %v1500 = vadd.f32 %v1492, %v1493
        %1501 = vadd.xlane.f32.xlu0 %v1500
        %v1502 = vpop.xlane.xlu0 %1501
        %v1503 = vrcp.pop 256.0
        %v1504 = vmul.f32 256.0, %v1503
        %v1505 = vsub.f32 1.0, %v1504
        %v1506 = vmul.f32 %v1503, %v1505
        %v1507 = vadd.f32 %v1503, %v1506
        %vm1508 = vweird.f32 %v1503
        %v1509 = vsel %vm1508, %v1503, %v1507
        %v1510 = vmul.f32 %v1496, %v1509
        %v1511 = vmul.f32 %v1499, %v1509
        %v1512 = vmul.f32 %v1502, %v1509
        %v1513 = vld [vmem:[%s10] sm:$0xff]
        %v1514 = vld [vmem:[%s10 + $0x8] sm:$0xff]
        %v1515 = vld [vmem:[%s10 + $0x10] sm:$0xff]
        %v1516 = vld [vmem:[%s10 + $0x18] sm:$0xff]
        %v1517 = vld [vmem:[%s10 + $0x20] sm:$0xff]
        %v1518 = vld [vmem:[%s10 + $0x28] sm:$0xff]
        %v1519 = vld [vmem:[%s10 + $0x30] sm:$0xff]
        %v1520 = vld [vmem:[%s10 + $0x38] sm:$0xff]
        %v1521 = vld [vmem:[%s10 + $0x40] sm:$0xff]
        %v1522 = vld [vmem:[%s10 + $0x48] sm:$0xff]
        %v1523 = vld [vmem:[%s10 + $0x50] sm:$0xff]
        %v1524 = vld [vmem:[%s10 + $0x58] sm:$0xff]
        %v1525 = vld [vmem:[%s11] sm:$0xff]
        %v1526 = vld [vmem:[%s11 + $0x8] sm:$0xff]
        %v1527 = vld [vmem:[%s11 + $0x10] sm:$0xff]
        %v1528 = vld [vmem:[%s11 + $0x18] sm:$0xff]
        %v1529 = vld [vmem:[%s11 + $0x20] sm:$0xff]
        %v1530 = vld [vmem:[%s11 + $0x28] sm:$0xff]
        %v1531 = vld [vmem:[%s11 + $0x30] sm:$0xff]
        %v1532 = vld [vmem:[%s11 + $0x38] sm:$0xff]
        %v1533 = vld [vmem:[%s11 + $0x40] sm:$0xff]
        %v1534 = vld [vmem:[%s11 + $0x48] sm:$0xff]
        %v1535 = vld [vmem:[%s11 + $0x50] sm:$0xff]
        %v1536 = vld [vmem:[%s11 + $0x58] sm:$0xff]
        %v1538 = vsel %vm1270, %v1513, 0
        %v1541 = vsel %vm1270, %v1514, 0
        %v1544 = vsel %vm1270, %v1515, 0
        %v1547 = vsel %vm1270, %v1516, 0
        %v1550 = vsel %vm1270, %v1517, 0
        %v1553 = vsel %vm1270, %v1518, 0
        %v1556 = vsel %vm1270, %v1519, 0
        %v1559 = vsel %vm1270, %v1520, 0
        %v1562 = vsel %vm1270, %v1521, 0
        %v1565 = vsel %vm1270, %v1522, 0
        %v1568 = vsel %vm1270, %v1523, 0
        %v1571 = vsel %vm1270, %v1524, 0
        %1573 = vmatpush.msra.mxu0 0.0
        %1574 = vmatpush.msra.mxu0 0.0
        %1575 = vmatpush.msra.mxu0 0.0
        %1576 = vmatpush.msra.mxu0 0.0
        %1577 = vmatpush.msra.mxu0 0.0
        %1578 = vmatpush.msra.mxu0 0.0
        %1579 = vmatpush.msra.mxu0 0.0
        %1580 = vmatpush.msra.mxu0 0.0
        %1581 = vmatpush.msra.mxu0 0.0
        %1582 = vmatpush.msra.mxu0 0.0
        %1583 = vmatpush.msra.mxu0 0.0
        %1584 = vmatpush.msra.mxu0 0.0
        %1585 = vmatpush.msra.mxu0 0.0
        %1586 = vmatpush.msra.mxu0 %v1512
        %1587 = vmatpush.msra.mxu0 %v1511
        %1588 = vmatpush.msra.mxu0 %v1510
        %1589 = vmatmul.f32.gmra.mxu0 %v1538
        %v1590 = vpop.f32.mrf.mxu0
        %v1591 = vadd.f32 %v1525, %v1590
        %1592 = vmatmul.f32.gmra.mxu0 %v1541
        %v1593 = vpop.f32.mrf.mxu0
        %v1594 = vadd.f32 %v1526, %v1593
        %1595 = vmatmul.f32.gmra.mxu0 %v1544
        %v1596 = vpop.f32.mrf.mxu0
        %v1597 = vadd.f32 %v1527, %v1596
        %1598 = vmatmul.f32.gmra.mxu0 %v1547
        %v1599 = vpop.f32.mrf.mxu0
        %v1600 = vadd.f32 %v1528, %v1599
        %1601 = vmatmul.f32.gmra.mxu0 %v1550
        %v1602 = vpop.f32.mrf.mxu0
        %v1603 = vadd.f32 %v1529, %v1602
        %1604 = vmatmul.f32.gmra.mxu0 %v1553
        %v1605 = vpop.f32.mrf.mxu0
        %v1606 = vadd.f32 %v1530, %v1605
        %1607 = vmatmul.f32.gmra.mxu0 %v1556
        %v1608 = vpop.f32.mrf.mxu0
        %v1609 = vadd.f32 %v1531, %v1608
        %1610 = vmatmul.f32.gmra.mxu0 %v1559
        %v1611 = vpop.f32.mrf.mxu0
        %v1612 = vadd.f32 %v1532, %v1611
        %1613 = vmatmul.f32.gmra.mxu0 %v1562
        %v1614 = vpop.f32.mrf.mxu0
        %v1615 = vadd.f32 %v1533, %v1614
        %1616 = vmatmul.f32.gmra.mxu0 %v1565
        %v1617 = vpop.f32.mrf.mxu0
        %v1618 = vadd.f32 %v1534, %v1617
        %1619 = vmatmul.f32.gmra.mxu0 %v1568
        %v1620 = vpop.f32.mrf.mxu0
        %v1621 = vadd.f32 %v1535, %v1620
        %1622 = vmatmul.f32.gmra.mxu0 %v1571
        %v1623 = vpop.f32.mrf.mxu0
        %v1624 = vadd.f32 %v1536, %v1623
        %1625 = vdwg.mxu0
        %v1626 = vxor.u32 %v1591, 2147483648
        %v1627 = vxor.u32 %v1594, 2147483648
        %v1628 = vxor.u32 %v1597, 2147483648
        %v1629 = vxor.u32 %v1600, 2147483648
        %v1630 = vxor.u32 %v1603, 2147483648
        %v1631 = vxor.u32 %v1606, 2147483648
        %v1632 = vxor.u32 %v1609, 2147483648
        %v1633 = vxor.u32 %v1612, 2147483648
        %v1634 = vxor.u32 %v1615, 2147483648
        %v1635 = vxor.u32 %v1618, 2147483648
        %v1636 = vxor.u32 %v1621, 2147483648
        %v1637 = vxor.u32 %v1624, 2147483648
        %v1638 = vmul.f32 %v1626, 1.442695
        %v1639 = vpow.pop %v1638
        %v1640 = vmul.f32 %v1627, 1.442695
        %v1641 = vpow.pop %v1640
        %v1642 = vmul.f32 %v1628, 1.442695
        %v1643 = vpow.pop %v1642
        %v1644 = vmul.f32 %v1629, 1.442695
        %v1645 = vpow.pop %v1644
        %v1646 = vmul.f32 %v1630, 1.442695
        %v1647 = vpow.pop %v1646
        %v1648 = vmul.f32 %v1631, 1.442695
        %v1649 = vpow.pop %v1648
        %v1650 = vmul.f32 %v1632, 1.442695
        %v1651 = vpow.pop %v1650
        %v1652 = vmul.f32 %v1633, 1.442695
        %v1653 = vpow.pop %v1652
        %v1654 = vmul.f32 %v1634, 1.442695
        %v1655 = vpow.pop %v1654
        %v1656 = vmul.f32 %v1635, 1.442695
        %v1657 = vpow.pop %v1656
        %v1658 = vmul.f32 %v1636, 1.442695
        %v1659 = vpow.pop %v1658
        %v1660 = vmul.f32 %v1637, 1.442695
        %v1661 = vpow.pop %v1660
        %v1662 = vadd.f32 %v1639, 1.0
        %v1663 = vadd.f32 %v1641, 1.0
        %v1664 = vadd.f32 %v1643, 1.0
        %v1665 = vadd.f32 %v1645, 1.0
        %v1666 = vadd.f32 %v1647, 1.0
        %v1667 = vadd.f32 %v1649, 1.0
        %v1668 = vadd.f32 %v1651, 1.0
        %v1669 = vadd.f32 %v1653, 1.0
        %v1670 = vadd.f32 %v1655, 1.0
        %v1671 = vadd.f32 %v1657, 1.0
        %v1672 = vadd.f32 %v1659, 1.0
        %v1673 = vadd.f32 %v1661, 1.0
        %v1674 = vrcp.pop %v1662
        %v1675 = vmul.f32 %v1662, %v1674
        %v1676 = vsub.f32 1.0, %v1675
        %v1677 = vmul.f32 %v1674, %v1676
        %v1678 = vadd.f32 %v1674, %v1677
        %vm1679 = vweird.f32 %v1662
        %vm1680 = vweird.f32 %v1674
        %vm1681 = vmor %vm1679, %vm1680
        %v1682 = vsel %vm1681, %v1674, %v1678
        %v1683 = vand.u32 2147483647, %v1662
        %vm1684 = vcmp.eq.f32.partialorder %v1683, 8.507059e+37
        %v1685 = vand.u32 %v1662, 2147483648
        %v1686 = vor.u32 1.1754944e-38, %v1685
        %v1687 = vsel %vm1684, %v1686, %v1682
        %v1688 = vmul.f32 1.0, %v1687
        %v1689 = vrcp.pop %v1663
        %v1690 = vmul.f32 %v1663, %v1689
        %v1691 = vsub.f32 1.0, %v1690
        %v1692 = vmul.f32 %v1689, %v1691
        %v1693 = vadd.f32 %v1689, %v1692
        %vm1694 = vweird.f32 %v1663
        %vm1695 = vweird.f32 %v1689
        %vm1696 = vmor %vm1694, %vm1695
        %v1697 = vsel %vm1696, %v1689, %v1693
        %v1698 = vand.u32 2147483647, %v1663
        %vm1699 = vcmp.eq.f32.partialorder %v1698, 8.507059e+37
        %v1700 = vand.u32 %v1663, 2147483648
        %v1701 = vor.u32 1.1754944e-38, %v1700
        %v1702 = vsel %vm1699, %v1701, %v1697
        %v1703 = vmul.f32 1.0, %v1702
        %v1704 = vrcp.pop %v1664
        %v1705 = vmul.f32 %v1664, %v1704
        %v1706 = vsub.f32 1.0, %v1705
        %v1707 = vmul.f32 %v1704, %v1706
        %v1708 = vadd.f32 %v1704, %v1707
        %vm1709 = vweird.f32 %v1664
        %vm1710 = vweird.f32 %v1704
        %vm1711 = vmor %vm1709, %vm1710
        %v1712 = vsel %vm1711, %v1704, %v1708
        %v1713 = vand.u32 2147483647, %v1664
        %vm1714 = vcmp.eq.f32.partialorder %v1713, 8.507059e+37
        %v1715 = vand.u32 %v1664, 2147483648
        %v1716 = vor.u32 1.1754944e-38, %v1715
        %v1717 = vsel %vm1714, %v1716, %v1712
        %v1718 = vmul.f32 1.0, %v1717
        %v1719 = vrcp.pop %v1665
        %v1720 = vmul.f32 %v1665, %v1719
        %v1721 = vsub.f32 1.0, %v1720
        %v1722 = vmul.f32 %v1719, %v1721
        %v1723 = vadd.f32 %v1719, %v1722
        %vm1724 = vweird.f32 %v1665
        %vm1725 = vweird.f32 %v1719
        %vm1726 = vmor %vm1724, %vm1725
        %v1727 = vsel %vm1726, %v1719, %v1723
        %v1728 = vand.u32 2147483647, %v1665
        %vm1729 = vcmp.eq.f32.partialorder %v1728, 8.507059e+37
        %v1730 = vand.u32 %v1665, 2147483648
        %v1731 = vor.u32 1.1754944e-38, %v1730
        %v1732 = vsel %vm1729, %v1731, %v1727
        %v1733 = vmul.f32 1.0, %v1732
        %v1734 = vrcp.pop %v1666
        %v1735 = vmul.f32 %v1666, %v1734
        %v1736 = vsub.f32 1.0, %v1735
        %v1737 = vmul.f32 %v1734, %v1736
        %v1738 = vadd.f32 %v1734, %v1737
        %vm1739 = vweird.f32 %v1666
        %vm1740 = vweird.f32 %v1734
        %vm1741 = vmor %vm1739, %vm1740
        %v1742 = vsel %vm1741, %v1734, %v1738
        %v1743 = vand.u32 2147483647, %v1666
        %vm1744 = vcmp.eq.f32.partialorder %v1743, 8.507059e+37
        %v1745 = vand.u32 %v1666, 2147483648
        %v1746 = vor.u32 1.1754944e-38, %v1745
        %v1747 = vsel %vm1744, %v1746, %v1742
        %v1748 = vmul.f32 1.0, %v1747
        %v1749 = vrcp.pop %v1667
        %v1750 = vmul.f32 %v1667, %v1749
        %v1751 = vsub.f32 1.0, %v1750
        %v1752 = vmul.f32 %v1749, %v1751
        %v1753 = vadd.f32 %v1749, %v1752
        %vm1754 = vweird.f32 %v1667
        %vm1755 = vweird.f32 %v1749
        %vm1756 = vmor %vm1754, %vm1755
        %v1757 = vsel %vm1756, %v1749, %v1753
        %v1758 = vand.u32 2147483647, %v1667
        %vm1759 = vcmp.eq.f32.partialorder %v1758, 8.507059e+37
        %v1760 = vand.u32 %v1667, 2147483648
        %v1761 = vor.u32 1.1754944e-38, %v1760
        %v1762 = vsel %vm1759, %v1761, %v1757
        %v1763 = vmul.f32 1.0, %v1762
        %v1764 = vrcp.pop %v1668
        %v1765 = vmul.f32 %v1668, %v1764
        %v1766 = vsub.f32 1.0, %v1765
        %v1767 = vmul.f32 %v1764, %v1766
        %v1768 = vadd.f32 %v1764, %v1767
        %vm1769 = vweird.f32 %v1668
        %vm1770 = vweird.f32 %v1764
        %vm1771 = vmor %vm1769, %vm1770
        %v1772 = vsel %vm1771, %v1764, %v1768
        %v1773 = vand.u32 2147483647, %v1668
        %vm1774 = vcmp.eq.f32.partialorder %v1773, 8.507059e+37
        %v1775 = vand.u32 %v1668, 2147483648
        %v1776 = vor.u32 1.1754944e-38, %v1775
        %v1777 = vsel %vm1774, %v1776, %v1772
        %v1778 = vmul.f32 1.0, %v1777
        %v1779 = vrcp.pop %v1669
        %v1780 = vmul.f32 %v1669, %v1779
        %v1781 = vsub.f32 1.0, %v1780
        %v1782 = vmul.f32 %v1779, %v1781
        %v1783 = vadd.f32 %v1779, %v1782
        %vm1784 = vweird.f32 %v1669
        %vm1785 = vweird.f32 %v1779
        %vm1786 = vmor %vm1784, %vm1785
        %v1787 = vsel %vm1786, %v1779, %v1783
        %v1788 = vand.u32 2147483647, %v1669
        %vm1789 = vcmp.eq.f32.partialorder %v1788, 8.507059e+37
        %v1790 = vand.u32 %v1669, 2147483648
        %v1791 = vor.u32 1.1754944e-38, %v1790
        %v1792 = vsel %vm1789, %v1791, %v1787
        %v1793 = vmul.f32 1.0, %v1792
        %v1794 = vrcp.pop %v1670
        %v1795 = vmul.f32 %v1670, %v1794
        %v1796 = vsub.f32 1.0, %v1795
        %v1797 = vmul.f32 %v1794, %v1796
        %v1798 = vadd.f32 %v1794, %v1797
        %vm1799 = vweird.f32 %v1670
        %vm1800 = vweird.f32 %v1794
        %vm1801 = vmor %vm1799, %vm1800
        %v1802 = vsel %vm1801, %v1794, %v1798
        %v1803 = vand.u32 2147483647, %v1670
        %vm1804 = vcmp.eq.f32.partialorder %v1803, 8.507059e+37
        %v1805 = vand.u32 %v1670, 2147483648
        %v1806 = vor.u32 1.1754944e-38, %v1805
        %v1807 = vsel %vm1804, %v1806, %v1802
        %v1808 = vmul.f32 1.0, %v1807
        %v1809 = vrcp.pop %v1671
        %v1810 = vmul.f32 %v1671, %v1809
        %v1811 = vsub.f32 1.0, %v1810
        %v1812 = vmul.f32 %v1809, %v1811
        %v1813 = vadd.f32 %v1809, %v1812
        %vm1814 = vweird.f32 %v1671
        %vm1815 = vweird.f32 %v1809
        %vm1816 = vmor %vm1814, %vm1815
        %v1817 = vsel %vm1816, %v1809, %v1813
        %v1818 = vand.u32 2147483647, %v1671
        %vm1819 = vcmp.eq.f32.partialorder %v1818, 8.507059e+37
        %v1820 = vand.u32 %v1671, 2147483648
        %v1821 = vor.u32 1.1754944e-38, %v1820
        %v1822 = vsel %vm1819, %v1821, %v1817
        %v1823 = vmul.f32 1.0, %v1822
        %v1824 = vrcp.pop %v1672
        %v1825 = vmul.f32 %v1672, %v1824
        %v1826 = vsub.f32 1.0, %v1825
        %v1827 = vmul.f32 %v1824, %v1826
        %v1828 = vadd.f32 %v1824, %v1827
        %vm1829 = vweird.f32 %v1672
        %vm1830 = vweird.f32 %v1824
        %vm1831 = vmor %vm1829, %vm1830
        %v1832 = vsel %vm1831, %v1824, %v1828
        %v1833 = vand.u32 2147483647, %v1672
        %vm1834 = vcmp.eq.f32.partialorder %v1833, 8.507059e+37
        %v1835 = vand.u32 %v1672, 2147483648
        %v1836 = vor.u32 1.1754944e-38, %v1835
        %v1837 = vsel %vm1834, %v1836, %v1832
        %v1838 = vmul.f32 1.0, %v1837
        %v1839 = vrcp.pop %v1673
        %v1840 = vmul.f32 %v1673, %v1839
        %v1841 = vsub.f32 1.0, %v1840
        %v1842 = vmul.f32 %v1839, %v1841
        %v1843 = vadd.f32 %v1839, %v1842
        %vm1844 = vweird.f32 %v1673
        %vm1845 = vweird.f32 %v1839
        %vm1846 = vmor %vm1844, %vm1845
        %v1847 = vsel %vm1846, %v1839, %v1843
        %v1848 = vand.u32 2147483647, %v1673
        %vm1849 = vcmp.eq.f32.partialorder %v1848, 8.507059e+37
        %v1850 = vand.u32 %v1673, 2147483648
        %v1851 = vor.u32 1.1754944e-38, %v1850
        %v1852 = vsel %vm1849, %v1851, %v1847
        %v1853 = vmul.f32 1.0, %v1852
        %v1854 = vadd.f32 %v1591, %v1688
        %v1855 = vadd.f32 %v1594, %v1703
        %v1856 = vadd.f32 %v1597, %v1718
        %v1857 = vadd.f32 %v1600, %v1733
        %v1858 = vadd.f32 %v1603, %v1748
        %v1859 = vadd.f32 %v1606, %v1763
        %v1860 = vadd.f32 %v1609, %v1778
        %v1861 = vadd.f32 %v1612, %v1793
        %v1862 = vadd.f32 %v1615, %v1808
        %v1863 = vadd.f32 %v1618, %v1823
        %v1864 = vadd.f32 %v1621, %v1838
        %v1865 = vadd.f32 %v1624, %v1853
        %v1866 = vld [vmem:[%s12] sm:$0xff]
        %v1867 = vld [vmem:[%s12 + $0x8] sm:$0xff]
        %v1868 = vld [vmem:[%s12 + $0x10] sm:$0xff]
        %v1869 = vld [vmem:[%s13] sm:$0xff]
        %v1870 = vld [vmem:[%s13 + $0x8] sm:$0xff]
        %v1871 = vld [vmem:[%s13 + $0x10] sm:$0xff]
        %vm1872 = vcmask 785408
        %v1874 = vsel %vm1872, %v1866, 0
        %v1877 = vsel %vm1872, %v1867, 0
        %v1880 = vsel %vm1872, %v1868, 0
        %1882 = vmatpush.msra.mxu0 0.0
        %1883 = vmatpush.msra.mxu0 0.0
        %1884 = vmatpush.msra.mxu0 0.0
        %1885 = vmatpush.msra.mxu0 0.0
        %1886 = vmatpush.msra.mxu0 %v1865
        %1887 = vmatpush.msra.mxu0 %v1864
        %1888 = vmatpush.msra.mxu0 %v1863
        %1889 = vmatpush.msra.mxu0 %v1862
        %1890 = vmatpush.msra.mxu0 %v1861
        %1891 = vmatpush.msra.mxu0 %v1860
        %1892 = vmatpush.msra.mxu0 %v1859
        %1893 = vmatpush.msra.mxu0 %v1858
        %1894 = vmatpush.msra.mxu0 %v1857
        %1895 = vmatpush.msra.mxu0 %v1856
        %1896 = vmatpush.msra.mxu0 %v1855
        %1897 = vmatpush.msra.mxu0 %v1854
        %1898 = vmatmul.f32.gmra.mxu0 %v1874
        %v1899 = vpop.f32.mrf.mxu0
        %v1900 = vadd.f32 %v1869, %v1899
        %1901 = vmatmul.f32.gmra.mxu0 %v1877
        %v1902 = vpop.f32.mrf.mxu0
        %v1903 = vadd.f32 %v1870, %v1902
        %1904 = vmatmul.f32.gmra.mxu0 %v1880
        %v1905 = vpop.f32.mrf.mxu0
        %v1906 = vadd.f32 %v1871, %v1905
        %1907 = vdwg.mxu0
        %v1908 = vxor.u32 %v1900, 2147483648
        %v1909 = vxor.u32 %v1903, 2147483648
        %v1910 = vxor.u32 %v1906, 2147483648
        %v1911 = vmul.f32 %v1908, 1.442695
        %v1912 = vpow.pop %v1911
        %v1913 = vmul.f32 %v1909, 1.442695
        %v1914 = vpow.pop %v1913
        %v1915 = vmul.f32 %v1910, 1.442695
        %v1916 = vpow.pop %v1915
        %v1917 = vadd.f32 %v1912, 1.0
        %v1918 = vadd.f32 %v1914, 1.0
        %v1919 = vadd.f32 %v1916, 1.0
        %v1920 = vrcp.pop %v1917
        %v1921 = vmul.f32 %v1917, %v1920
        %v1922 = vsub.f32 1.0, %v1921
        %v1923 = vmul.f32 %v1920, %v1922
        %v1924 = vadd.f32 %v1920, %v1923
        %vm1925 = vweird.f32 %v1917
        %vm1926 = vweird.f32 %v1920
        %vm1927 = vmor %vm1925, %vm1926
        %v1928 = vsel %vm1927, %v1920, %v1924
        %v1929 = vand.u32 2147483647, %v1917
        %vm1930 = vcmp.eq.f32.partialorder %v1929, 8.507059e+37
        %v1931 = vand.u32 %v1917, 2147483648
        %v1932 = vor.u32 1.1754944e-38, %v1931
        %v1933 = vsel %vm1930, %v1932, %v1928
        %v1934 = vmul.f32 1.0, %v1933
        %v1935 = vrcp.pop %v1918
        %v1936 = vmul.f32 %v1918, %v1935
        %v1937 = vsub.f32 1.0, %v1936
        %v1938 = vmul.f32 %v1935, %v1937
        %v1939 = vadd.f32 %v1935, %v1938
        %vm1940 = vweird.f32 %v1918
        %vm1941 = vweird.f32 %v1935
        %vm1942 = vmor %vm1940, %vm1941
        %v1943 = vsel %vm1942, %v1935, %v1939
        %v1944 = vand.u32 2147483647, %v1918
        %vm1945 = vcmp.eq.f32.partialorder %v1944, 8.507059e+37
        %v1946 = vand.u32 %v1918, 2147483648
        %v1947 = vor.u32 1.1754944e-38, %v1946
        %v1948 = vsel %vm1945, %v1947, %v1943
        %v1949 = vmul.f32 1.0, %v1948
        %v1950 = vrcp.pop %v1919
        %v1951 = vmul.f32 %v1919, %v1950
        %v1952 = vsub.f32 1.0, %v1951
        %v1953 = vmul.f32 %v1950, %v1952
        %v1954 = vadd.f32 %v1950, %v1953
        %vm1955 = vweird.f32 %v1919
        %vm1956 = vweird.f32 %v1950
        %vm1957 = vmor %vm1955, %vm1956
        %v1958 = vsel %vm1957, %v1950, %v1954
        %v1959 = vand.u32 2147483647, %v1919
        %vm1960 = vcmp.eq.f32.partialorder %v1959, 8.507059e+37
        %v1961 = vand.u32 %v1919, 2147483648
        %v1962 = vor.u32 1.1754944e-38, %v1961
        %v1963 = vsel %vm1960, %v1962, %v1958
        %v1964 = vmul.f32 1.0, %v1963
        %1966 = vset.pattern.permute.xlu0 0
        %1967 = vperm.xlu0 %1966, %v1934
        %v1968 = vpop.permute.xlu0 %1967
        %1971 = vset.pattern.permute.xlu0 0
        %1972 = vperm.xlu0 %1971, %v1949
        %v1973 = vpop.permute.xlu0 %1972
        %1976 = vset.pattern.permute.xlu0 0
        %1977 = vperm.xlu0 %1976, %v1964
        %v1978 = vpop.permute.xlu0 %1977
        %v1980 = vmul.f32 %v1488, %v1968
        %v1981 = vmul.f32 %v1489, %v1968
        %v1982 = vmul.f32 %v1490, %v1973
        %v1983 = vmul.f32 %v1491, %v1973
        %v1984 = vmul.f32 %v1492, %v1978
        %v1985 = vmul.f32 %v1493, %v1978
        %v1986 = vld [vmem:[%s14] sm:$0x3]
        %v1987 = vpack.c.bf16 %v1982, %v1980
        %v1988 = vpack.c.bf16 %v1983, %v1981
        %v1989 = vpack.c.bf16 %v1984, %v1984
        %v1990 = vpack.c.bf16 %v1985, %v1985
        %v1991 = vld [vmem:[%s15] sm:$0xf]
        %1993 = vset.pattern.permute.xlu0 0
        %1994 = vperm.xlu0 %1993, %v1991
        %v1995 = vpop.permute.xlu0 %1994
        %v1998 = vsel %vm1270, %v1986, 0
        %v2001 = vsel %vm1277, %v1989, 0
        %v2004 = vsel %vm1277, %v1990, 0
        %2006 = vmatpush.bf16.msra.mxu0 0
        %2007 = vmatpush.bf16.msra.mxu0 0
        %2008 = vmatpush.bf16.msra.mxu0 0
        %2009 = vmatpush.bf16.msra.mxu0 0
        %2010 = vmatpush.bf16.msra.mxu0 0
        %2011 = vmatpush.bf16.msra.mxu0 0
        %2012 = vmatpush.bf16.msra.mxu0 %v2001
        %2013 = vmatpush.bf16.msra.mxu0 %v1987
        %2014 = vmatmul.bf16.gmra.mxu0 %v1998
        %v2015 = vpop.f32.mrf.mxu0
        %v2016 = vadd.f32 %v1995, %v2015
        %v2017 = vpop.f32.mrf.mxu0
        %2018 = vdwg.mxu0
        %2019 = vmatpush.bf16.msra.mxu0 0
        %2020 = vmatpush.bf16.msra.mxu0 0
        %2021 = vmatpush.bf16.msra.mxu0 0
        %2022 = vmatpush.bf16.msra.mxu0 0
        %2023 = vmatpush.bf16.msra.mxu0 0
        %2024 = vmatpush.bf16.msra.mxu0 0
        %2025 = vmatpush.bf16.msra.mxu0 %v2004
        %2026 = vmatpush.bf16.msra.mxu0 %v1988
        %2027 = vmatmul.bf16.gmra.mxu0 %v1998
        %v2028 = vpop.f32.mrf.mxu0
        %v2029 = vadd.f32 %v1995, %v2028
        %v2030 = vpop.f32.mrf.mxu0
        %2031 = vdwg.mxu0
        %2032 = vst [vmem:[#allocation1] ss:$2 sm:$0xff] %v521
        %v2033 = vld.sshfl [vmem:[#allocation1] sm:$0xff pattern:$0x75316420]
        %v2034 = vld.sshfl [vmem:[#allocation1 + $0x8] sm:$0xff pattern:$0x75316420]
        %v2037 = vadd.f32 %v2016, %v2033
        %v2038 = vadd.f32 %v2029, %v2034
        %v2041 = vrot.slane %v2038, 4
        %v2042 = vsel %vm1277, %v2037, %v2041
        %2044 = vst [vmem:[%s514] sm:$0xff] %v2042
        %s2045 = sand.u32 %s379, 1
        %s2046 = scalar_lea.sflag [#allocation3], %s2045
        %s2047 = sand.u32 %s379, 1
        %s2048 = smul.addr %s2047, 8
        %s2049 = scalar_lea.vmem [#allocation2], %s2048
        // Predicated region
        $region85: #{tpu_custom_call.1} parent=83 // pred_check
          %p2050 = pneg %p389
        $region86: #{tpu_custom_call.1} parent=83 // pred_check_branch
          %2052 = sbr.rel (%p2050) target = $region88
        $region87: #{tpu_custom_call.1} parent=83 // pred_region
          %2054 = vsyncadd %s2046, 0
          %s2055 = smul.addr %s30, 2
          %s2056 = smul.addr %s2055, 4
          %s2057 = scalar_lea.hbm %s16, %s2056
          %s2059 = sshll.u32 %s2049, 4
          %s2060 = int_to_ptr.vmem [resolvable:$true] %s2059
          %s2061 = sshll.u32 %s2057, 4
          %s2062 = int_to_ptr.hbm [resolvable:$true] %s2061
          %2064 = dma.vmem_to_hbm [thread:$0]  %s2060, 128, %s2062, %s2046
        $region88: #{tpu_custom_call.1} parent=83 // pred_fallthru
          _
      $region84: #{tpu_custom_call.1} parent=5 // pred_fallthru
        _
      %p2065 = scmp.le.s32.totalorder 2, %s25
      // Predicated region
      $region89: #{tpu_custom_call.1} parent=5 // pred_check
        %p2066 = pneg %p2065
      $region90: #{tpu_custom_call.1} parent=5 // pred_check_branch
        %2068 = sbr.rel (%p2066) target = $region92
      $region91: #{tpu_custom_call.1} parent=5 // pred_region
        %s2069 = ssub.s32 %s25, 2
        // Predicated region
        $region93: #{tpu_custom_call.1} parent=91 // pred_check
          %p2070 = pneg %p395
        $region94: #{tpu_custom_call.1} parent=91 // pred_check_branch
          %2072 = sbr.rel (%p2070) target = $region96
        $region95: #{tpu_custom_call.1} parent=91 // pred_region
          %s2073 = sand.u32 %s380, 1
          %s2074 = scalar_lea.sflag [#allocation3], %s2073
          %s2075 = sand.u32 %s380, 1
          %s2076 = smul.addr %s2075, 8
          %s2077 = scalar_lea.vmem [#allocation2], %s2076
          %2079 = dma.done %s2074, 128
        $region96: #{tpu_custom_call.1} parent=91 // pred_fallthru
          _
      $region92: #{tpu_custom_call.1} parent=5 // pred_fallthru
        _
    $region6: #{tpu_custom_call.1} parent=1 // loop_footer
      %s29 = sadd.s32 1, %s25
    $region7: #{tpu_custom_call.1} parent=1 // loop_footer_branch
      %24 = sbr.rel target = $region3
    $region8: #{tpu_custom_call.1} parent=1 // loop_exit
      _
    %2080 = vsyncpa [#allocation3], 1
    %s2081 = scalar_lea.sflag [#allocation3], 1
    %2082 = vsyncpa %s2081, 1

</llo_original>
